<compile_context>
chip_gen: v7x
topology: tpu7x:2x2x1
jax: 0.10.0
libtpu: 0.0.40
codegen_flags: <defaults>
</compile_context>

<pallas_src>
import functools

import jax
import jax.numpy as jnp
from jax.experimental import pallas as pl
from jax.experimental.pallas import tpu as pltpu

EPS = 1e-5


def _fused_kernel(x_ref, w_ref, g_ref, b_ref, o_ref, *, inv_m):
    """x_ref: (Cin, N*Ho, Wo) zero-padded input (channel-leading).
       w_ref: (Cin, Cout, 1, 1) conv weights.
       g_ref, b_ref: (Cout, 1, 1) BN affine params.
       o_ref: (Cout, N*Ho, Wo) = sigmoid(BN_train(conv1x1(x)))."""
    x = x_ref[...]                                   # (Cin, NHo, Wo)
    w = w_ref[...]                                   # (Cin, Cout, 1, 1)

    # 1x1 conv as Cin broadcast-FMAs on the VPU (no MXU push/pop for a 3x8 matmul).
    y = w[0] * x[0]                                  # (Cout,1,1)*(NHo,Wo) -> (Cout,NHo,Wo)
    for ci in range(1, x.shape[0]):
        y = y + w[ci] * x[ci]

    # Per-channel batch statistics in one pass (sum + sum-of-squares); the zero border
    # is part of the domain, so the divisor is the full padded pixel count (inv_m).
    s = jnp.sum(jnp.sum(y, axis=2, keepdims=True), axis=1, keepdims=True)       # (Cout,1,1)
    ssq = jnp.sum(jnp.sum(y * y, axis=2, keepdims=True), axis=1, keepdims=True)  # (Cout,1,1)

    mean = s * inv_m
    var = jnp.maximum(ssq * inv_m - mean * mean, 0.0)          # biased variance (training BN)
    scale = g_ref[...] * jax.lax.rsqrt(var + EPS)               # (Cout,1,1)
    shift = b_ref[...] - mean * scale                           # (Cout,1,1)

    z = y * scale + shift
    # sigmoid(z) == 0.5 * (tanh(z/2) + 1): single EUP op instead of exp + divide.
    o_ref[...] = 0.5 * (jnp.tanh(0.5 * z) + 1.0)


def model_forward(x1, x2, params):
    """x1: (N, Cin, H, W) float32 NCHW (PyTorch convention). x2 is unused by the output."""
    del x2
    wT, _b, gamma, beta = params          # wT: (Cout, Cin); conv bias cancels under BN
    N, C, H, W = x1.shape
    Cout = wT.shape[0]
    Ho, Wo = H + 2, W + 2                 # padding=1 with a 1x1 kernel
    m_tot = N * Ho * Wo                   # BN statistics include the zero border

    # Channel-leading layout. For N == 1 this transpose only moves a degenerate dim
    # (bitcast); the zero-pad is the conv's own padding and is the only real XLA copy.
    x_cl = jnp.transpose(x1, (1, 0, 2, 3))                        # (C, N, H, W)
    x_pad = jnp.pad(x_cl, ((0, 0), (0, 0), (1, 1), (1, 1)))       # (C, N, Ho, Wo)
    x_k = x_pad.reshape(C, N * Ho, Wo)                            # batch folded into sublanes

    # Tiny parameter re-shapes (<=96 B each) so the kernel never needs a relayout:
    w_k = jnp.transpose(wT)[:, :, None, None]                     # (C, Cout, 1, 1)
    g_k = gamma[:, None, None]                                    # (Cout, 1, 1)
    b_k = beta[:, None, None]                                     # (Cout, 1, 1)

    out_k = pl.pallas_call(
        functools.partial(_fused_kernel, inv_m=1.0 / m_tot),
        out_shape=jax.ShapeDtypeStruct((Cout, N * Ho, Wo), jnp.float32),
        grid=(1,),
        in_specs=[
            pl.BlockSpec((C, N * Ho, Wo), lambda i: (0, 0, 0)),
            pl.BlockSpec((C, Cout, 1, 1), lambda i: (0, 0, 0, 0)),
            pl.BlockSpec((Cout, 1, 1), lambda i: (0, 0, 0)),
            pl.BlockSpec((Cout, 1, 1), lambda i: (0, 0, 0)),
        ],
        out_specs=pl.BlockSpec((Cout, N * Ho, Wo), lambda i: (0, 0, 0)),
        compiler_params=pltpu.CompilerParams(dimension_semantics=("arbitrary",)),
    )(x_k, w_k, g_k, b_k)

    # Back to NCHW: for N == 1 both ops are pure relabels (no data movement).
    out = out_k.reshape(Cout, N, Ho, Wo).transpose(1, 0, 2, 3)    # (N, Cout, Ho, Wo)
    return out


def reference_forward(x1, params):
    """Plain-JAX reference (keeps the conv bias; BN mean-subtraction cancels it)."""
    wT, b, gamma, beta = params
    xp = jnp.pad(x1, ((0, 0), (0, 0), (1, 1), (1, 1)))
    y = jnp.einsum("nchw,dc->ndhw", xp, wT) + b[None, :, None, None]
    mean = jnp.mean(y, axis=(0, 2, 3), keepdims=True)
    var = jnp.mean((y - mean) ** 2, axis=(0, 2, 3), keepdims=True)
    y_hat = (y - mean) * jax.lax.rsqrt(var + EPS)
    z = gamma[None, :, None, None] * y_hat + beta[None, :, None, None]
    return jax.nn.sigmoid(z)


def init_params(key, c_in=3, c_out=8):
    k_w, k_b = jax.random.split(key)
    # the conv referenced by the returned branch is undefined in the source module:
    # instantiate it deterministically here. wT is (Cout, Cin).
    wT = jax.random.normal(k_w, (c_out, c_in), dtype=jnp.float32) * 0.1
    b = jax.random.normal(k_b, (c_out,), dtype=jnp.float32) * 0.1
    # BatchNorm2d(8) default affine init (PyTorch): gamma=1, beta=0
    gamma = jnp.ones((c_out,), dtype=jnp.float32)
    beta = jnp.zeros((c_out,), dtype=jnp.float32)
    return wT, b, gamma, beta


if __name__ == "__main__":
    key = jax.random.PRNGKey(0)
    k_x1, k_x2, k_p = jax.random.split(key, 3)

    # shape from the original module spec: x1 = torch.randn(1, 3, 64, 64)
    N, C, H, W = 1, 3, 64, 64
    x1 = jax.random.normal(k_x1, (N, C, H, W), dtype=jnp.float32)
    x2 = jax.random.normal(k_x2, (N, C, H, W), dtype=jnp.float32)  # unused by output
    params = init_params(k_p)

    fwd = jax.jit(model_forward)
    out = jax.block_until_ready(fwd(x1, x2, params))

    ref = jax.block_until_ready(reference_forward(x1, params))
    assert out.shape == (N, 8, H + 2, W + 2), out.shape
    max_err = float(jnp.max(jnp.abs(out - ref)))
    assert jnp.allclose(out, ref, atol=3e-5, rtol=1e-4), f"mismatch vs reference: {max_err}"

    print("KERNEL_OK")
</pallas_src>

<mosaic_0001>
module attributes {stable_mosaic.version = 11 : i64} {
  func.func @_fused_kernel(%arg0: i32, %arg1: memref<3x66x66xf32, #tpu.memory_space<vmem>>, %arg2: memref<3x8x1x1xf32, #tpu.memory_space<vmem>>, %arg3: memref<8x1x1xf32, #tpu.memory_space<vmem>>, %arg4: memref<8x1x1xf32, #tpu.memory_space<vmem>>, %arg5: memref<8x66x66xf32, #tpu.memory_space<vmem>>) attributes {dimension_semantics = [#tpu.dimension_semantics<arbitrary>], iteration_bounds = array<i64: 1>, scalar_prefetch = 0 : i64, scratch_operands = 0 : i64, tpu.core_type = #tpu.core_type<tc>, window_params = [{pipeline_mode = #tpu.pipeline_mode<synchronous>, transform_indices = @transform_0, window_bounds = array<i64: 3, 66, 66>}, {pipeline_mode = #tpu.pipeline_mode<synchronous>, transform_indices = @transform_1, window_bounds = array<i64: 3, 8, 1, 1>}, {pipeline_mode = #tpu.pipeline_mode<synchronous>, transform_indices = @transform_2, window_bounds = array<i64: 8, 1, 1>}, {pipeline_mode = #tpu.pipeline_mode<synchronous>, transform_indices = @transform_3, window_bounds = array<i64: 8, 1, 1>}, {pipeline_mode = #tpu.pipeline_mode<synchronous>, transform_indices = @transform_4, window_bounds = array<i64: 8, 66, 66>}]} {
    %c0 = arith.constant 0 : index
    %c0_0 = arith.constant 0 : index
    %c0_1 = arith.constant 0 : index
    %0 = vector.load %arg1[%c0, %c0_0, %c0_1] : memref<3x66x66xf32, #tpu.memory_space<vmem>>, vector<3x66x66xf32>
    %c0_2 = arith.constant 0 : index
    %c0_3 = arith.constant 0 : index
    %c0_4 = arith.constant 0 : index
    %c0_5 = arith.constant 0 : index
    %1 = vector.load %arg2[%c0_2, %c0_3, %c0_4, %c0_5] : memref<3x8x1x1xf32, #tpu.memory_space<vmem>>, vector<3x8x1x1xf32>
    %2 = vector.extract_strided_slice %1 {offsets = [0, 0, 0, 0], sizes = [1, 8, 1, 1], strides = [1, 1, 1, 1]} : vector<3x8x1x1xf32> to vector<1x8x1x1xf32>
    %3 = vector.shape_cast %2 : vector<1x8x1x1xf32> to vector<8x1x1xf32>
    %4 = vector.extract_strided_slice %0 {offsets = [0, 0, 0], sizes = [1, 66, 66], strides = [1, 1, 1]} : vector<3x66x66xf32> to vector<1x66x66xf32>
    %5 = vector.shape_cast %4 : vector<1x66x66xf32> to vector<66x66xf32>
    %6 = vector.shape_cast %5 : vector<66x66xf32> to vector<1x66x66xf32>
    %7 = vector.broadcast %3 : vector<8x1x1xf32> to vector<8x66x66xf32>
    %8 = vector.broadcast %6 : vector<1x66x66xf32> to vector<8x66x66xf32>
    %9 = arith.mulf %7, %8 : vector<8x66x66xf32>
    %10 = vector.extract_strided_slice %1 {offsets = [1, 0, 0, 0], sizes = [1, 8, 1, 1], strides = [1, 1, 1, 1]} : vector<3x8x1x1xf32> to vector<1x8x1x1xf32>
    %11 = vector.shape_cast %10 : vector<1x8x1x1xf32> to vector<8x1x1xf32>
    %12 = vector.extract_strided_slice %0 {offsets = [1, 0, 0], sizes = [1, 66, 66], strides = [1, 1, 1]} : vector<3x66x66xf32> to vector<1x66x66xf32>
    %13 = vector.shape_cast %12 : vector<1x66x66xf32> to vector<66x66xf32>
    %14 = vector.shape_cast %13 : vector<66x66xf32> to vector<1x66x66xf32>
    %15 = vector.broadcast %11 : vector<8x1x1xf32> to vector<8x66x66xf32>
    %16 = vector.broadcast %14 : vector<1x66x66xf32> to vector<8x66x66xf32>
    %17 = arith.mulf %15, %16 : vector<8x66x66xf32>
    %18 = arith.addf %9, %17 : vector<8x66x66xf32>
    %19 = vector.extract_strided_slice %1 {offsets = [2, 0, 0, 0], sizes = [1, 8, 1, 1], strides = [1, 1, 1, 1]} : vector<3x8x1x1xf32> to vector<1x8x1x1xf32>
    %20 = vector.shape_cast %19 : vector<1x8x1x1xf32> to vector<8x1x1xf32>
    %21 = vector.extract_strided_slice %0 {offsets = [2, 0, 0], sizes = [1, 66, 66], strides = [1, 1, 1]} : vector<3x66x66xf32> to vector<1x66x66xf32>
    %22 = vector.shape_cast %21 : vector<1x66x66xf32> to vector<66x66xf32>
    %23 = vector.shape_cast %22 : vector<66x66xf32> to vector<1x66x66xf32>
    %24 = vector.broadcast %20 : vector<8x1x1xf32> to vector<8x66x66xf32>
    %25 = vector.broadcast %23 : vector<1x66x66xf32> to vector<8x66x66xf32>
    %26 = arith.mulf %24, %25 : vector<8x66x66xf32>
    %27 = arith.addf %18, %26 : vector<8x66x66xf32>
    %cst = arith.constant dense<0.000000e+00> : vector<8x66xf32>
    %28 = vector.multi_reduction <add>, %27, %cst [2] : vector<8x66x66xf32> to vector<8x66xf32>
    %29 = vector.shape_cast %28 : vector<8x66xf32> to vector<8x66x1xf32>
    %cst_6 = arith.constant dense<0.000000e+00> : vector<8x1xf32>
    %30 = vector.multi_reduction <add>, %29, %cst_6 [1] : vector<8x66x1xf32> to vector<8x1xf32>
    %31 = vector.shape_cast %30 : vector<8x1xf32> to vector<8x1x1xf32>
    %32 = arith.mulf %27, %27 : vector<8x66x66xf32>
    %cst_7 = arith.constant dense<0.000000e+00> : vector<8x66xf32>
    %33 = vector.multi_reduction <add>, %32, %cst_7 [2] : vector<8x66x66xf32> to vector<8x66xf32>
    %34 = vector.shape_cast %33 : vector<8x66xf32> to vector<8x66x1xf32>
    %cst_8 = arith.constant dense<0.000000e+00> : vector<8x1xf32>
    %35 = vector.multi_reduction <add>, %34, %cst_8 [1] : vector<8x66x1xf32> to vector<8x1xf32>
    %36 = vector.shape_cast %35 : vector<8x1xf32> to vector<8x1x1xf32>
    %cst_9 = arith.constant 2.2956841E-4 : f32
    %37 = vector.broadcast %cst_9 : f32 to vector<8x1x1xf32>
    %38 = arith.mulf %31, %37 : vector<8x1x1xf32>
    %cst_10 = arith.constant 2.2956841E-4 : f32
    %39 = vector.broadcast %cst_10 : f32 to vector<8x1x1xf32>
    %40 = arith.mulf %36, %39 : vector<8x1x1xf32>
    %41 = arith.mulf %38, %38 : vector<8x1x1xf32>
    %42 = arith.subf %40, %41 : vector<8x1x1xf32>
    %cst_11 = arith.constant 0.000000e+00 : f32
    %43 = vector.broadcast %cst_11 : f32 to vector<8x1x1xf32>
    %44 = arith.maximumf %42, %43 : vector<8x1x1xf32>
    %c0_12 = arith.constant 0 : index
    %c0_13 = arith.constant 0 : index
    %c0_14 = arith.constant 0 : index
    %45 = vector.load %arg3[%c0_12, %c0_13, %c0_14] : memref<8x1x1xf32, #tpu.memory_space<vmem>>, vector<8x1x1xf32>
    %cst_15 = arith.constant 9.99999974E-6 : f32
    %46 = vector.broadcast %cst_15 : f32 to vector<8x1x1xf32>
    %47 = arith.addf %44, %46 : vector<8x1x1xf32>
    %48 = math.rsqrt %47 : vector<8x1x1xf32>
    %49 = arith.mulf %45, %48 : vector<8x1x1xf32>
    %c0_16 = arith.constant 0 : index
    %c0_17 = arith.constant 0 : index
    %c0_18 = arith.constant 0 : index
    %50 = vector.load %arg4[%c0_16, %c0_17, %c0_18] : memref<8x1x1xf32, #tpu.memory_space<vmem>>, vector<8x1x1xf32>
    %51 = arith.mulf %38, %49 : vector<8x1x1xf32>
    %52 = arith.subf %50, %51 : vector<8x1x1xf32>
    %53 = vector.broadcast %49 : vector<8x1x1xf32> to vector<8x66x66xf32>
    %54 = arith.mulf %27, %53 : vector<8x66x66xf32>
    %55 = vector.broadcast %52 : vector<8x1x1xf32> to vector<8x66x66xf32>
    %56 = arith.addf %54, %55 : vector<8x66x66xf32>
    %cst_19 = arith.constant 5.000000e-01 : f32
    %57 = vector.broadcast %cst_19 : f32 to vector<8x66x66xf32>
    %58 = arith.mulf %57, %56 : vector<8x66x66xf32>
    %59 = math.tanh %58 : vector<8x66x66xf32>
    %cst_20 = arith.constant 1.000000e+00 : f32
    %60 = vector.broadcast %cst_20 : f32 to vector<8x66x66xf32>
    %61 = arith.addf %59, %60 : vector<8x66x66xf32>
    %cst_21 = arith.constant 5.000000e-01 : f32
    %62 = vector.broadcast %cst_21 : f32 to vector<8x66x66xf32>
    %63 = arith.mulf %62, %61 : vector<8x66x66xf32>
    %c0_22 = arith.constant 0 : index
    %c0_23 = arith.constant 0 : index
    %c0_24 = arith.constant 0 : index
    %64 = vector.load %arg5[%c0_22, %c0_23, %c0_24] : memref<8x66x66xf32, #tpu.memory_space<vmem>>, vector<8x66x66xf32>
    tpu.vector_store %arg5[%c0_22, %c0_23, %c0_24], %63 {strides = array<i32>} : memref<8x66x66xf32, #tpu.memory_space<vmem>>, vector<8x66x66xf32>,
    return
  }
  func.func @transform_0(%arg0: i32) -> (i32, i32, i32) {
    %c0_i32 = arith.constant 0 : i32
    %c0_i32_0 = arith.constant 0 : i32
    %c0_i32_1 = arith.constant 0 : i32
    %c0_i32_2 = arith.constant 0 : i32
    return %c0_i32, %c0_i32_0, %c0_i32_1 : i32, i32, i32
  }
  func.func @transform_1(%arg0: i32) -> (i32, i32, i32, i32) {
    %c0_i32 = arith.constant 0 : i32
    %c0_i32_0 = arith.constant 0 : i32
    %c0_i32_1 = arith.constant 0 : i32
    %c0_i32_2 = arith.constant 0 : i32
    %c0_i32_3 = arith.constant 0 : i32
    return %c0_i32, %c0_i32_0, %c0_i32_1, %c0_i32_2 : i32, i32, i32, i32
  }
  func.func @transform_2(%arg0: i32) -> (i32, i32, i32) {
    %c0_i32 = arith.constant 0 : i32
    %c0_i32_0 = arith.constant 0 : i32
    %c0_i32_1 = arith.constant 0 : i32
    %c0_i32_2 = arith.constant 0 : i32
    return %c0_i32, %c0_i32_0, %c0_i32_1 : i32, i32, i32
  }
  func.func @transform_3(%arg0: i32) -> (i32, i32, i32) {
    %c0_i32 = arith.constant 0 : i32
    %c0_i32_0 = arith.constant 0 : i32
    %c0_i32_1 = arith.constant 0 : i32
    %c0_i32_2 = arith.constant 0 : i32
    return %c0_i32, %c0_i32_0, %c0_i32_1 : i32, i32, i32
  }
  func.func @transform_4(%arg0: i32) -> (i32, i32, i32) {
    %c0_i32 = arith.constant 0 : i32
    %c0_i32_0 = arith.constant 0 : i32
    %c0_i32_1 = arith.constant 0 : i32
    %c0_i32_2 = arith.constant 0 : i32
    return %c0_i32, %c0_i32_0, %c0_i32_1 : i32, i32, i32
  }
}

</mosaic_0001>

<llo_original>
// kernel: model_forward.1
$region0: #{model_forward.1}
  #allocation0 [shape = 'u32[]', space=smem, size = 0x4, offset = 0x4, fixed_abs, tag = 'smem constant byte address 0x4 - core index']
  #allocation1 [shape = 'u32[144,128]{1,0:T(1,128)}', space=vmem, size = 0x12000, scoped, tag = 'internal scratch']
  %s0 = inlined_call_operand.vmem [shape: f32[3,66,66], index: 0, kind: input, shape index: {}]
  %s1 = inlined_call_operand.vmem [shape: f32[3,8,1,1], index: 1, kind: input, shape index: {}]
  %s2 = inlined_call_operand.vmem [shape: f32[8,1,1], index: 2, kind: input, shape index: {}]
  %s3 = inlined_call_operand.vmem [shape: f32[8,1,1], index: 3, kind: input, shape index: {}]
  %s4 = inlined_call_operand.vmem [shape: f32[8,66,66], index: 4, kind: output, shape index: {}]
  %s5 = sld [smem:[#allocation0]]
  $region26: #{model_forward.1} parent=0
    _
  %s7 = ssub.s32 1, %s5
  %s8 = scalar_select 0, %s7, %s5
  // Predicated region
  $region2: #{model_forward.1} parent=0 // pred_check
    _
  $region3: #{model_forward.1} parent=0 // pred_check_branch
    %10 = sbr.rel (0) target = $region5
  $region4: #{model_forward.1} parent=0 // pred_region
    _
  $region5: #{model_forward.1} parent=0 // pred_fallthru
    _
  // Predicated region
  $region6: #{model_forward.1} parent=0 // pred_check
    _
  $region7: #{model_forward.1} parent=0 // pred_check_branch
    %12 = sbr.rel (0) target = $region9
  $region8: #{model_forward.1} parent=0 // pred_region
    _
  $region9: #{model_forward.1} parent=0 // pred_fallthru
    _
  // Predicated region
  $region10: #{model_forward.1} parent=0 // pred_check
    _
  $region11: #{model_forward.1} parent=0 // pred_check_branch
    %14 = sbr.rel (0) target = $region13
  $region12: #{model_forward.1} parent=0 // pred_region
    _
  $region13: #{model_forward.1} parent=0 // pred_fallthru
    _
  // Predicated region
  $region14: #{model_forward.1} parent=0 // pred_check
    _
  $region15: #{model_forward.1} parent=0 // pred_check_branch
    %16 = sbr.rel (0) target = $region17
  $region16: #{model_forward.1} parent=0 // pred_region
    _
  $region17: #{model_forward.1} parent=0 // pred_fallthru
    _
  %v17 = vld [vmem:[%s0] sm:$0xff]
  %v18 = vld [vmem:[%s0 + $0x8] sm:$0xff]
  %v19 = vld [vmem:[%s0 + $0x10] sm:$0xff]
  %v20 = vld [vmem:[%s0 + $0x18] sm:$0xff]
  %v21 = vld [vmem:[%s0 + $0x20] sm:$0xff]
  %v22 = vld [vmem:[%s0 + $0x28] sm:$0xff]
  %v23 = vld [vmem:[%s0 + $0x30] sm:$0xff]
  %v24 = vld [vmem:[%s0 + $0x38] sm:$0xff]
  %v25 = vld [vmem:[%s0 + $0x40] sm:$0x3]
  %v26 = vld [vmem:[%s0 + $0x48] sm:$0xff]
  %v27 = vld [vmem:[%s0 + $0x50] sm:$0xff]
  %v28 = vld [vmem:[%s0 + $0x58] sm:$0xff]
  %v29 = vld [vmem:[%s0 + $0x60] sm:$0xff]
  %v30 = vld [vmem:[%s0 + $0x68] sm:$0xff]
  %v31 = vld [vmem:[%s0 + $0x70] sm:$0xff]
  %v32 = vld [vmem:[%s0 + $0x78] sm:$0xff]
  %v33 = vld [vmem:[%s0 + $0x80] sm:$0xff]
  %v34 = vld [vmem:[%s0 + $0x88] sm:$0x3]
  %v35 = vld [vmem:[%s0 + $0x90] sm:$0xff]
  %v36 = vld [vmem:[%s0 + $0x98] sm:$0xff]
  %v37 = vld [vmem:[%s0 + $0xa0] sm:$0xff]
  %v38 = vld [vmem:[%s0 + $0xa8] sm:$0xff]
  %v39 = vld [vmem:[%s0 + $0xb0] sm:$0xff]
  %v40 = vld [vmem:[%s0 + $0xb8] sm:$0xff]
  %v41 = vld [vmem:[%s0 + $0xc0] sm:$0xff]
  %v42 = vld [vmem:[%s0 + $0xc8] sm:$0xff]
  %v43 = vld [vmem:[%s0 + $0xd0] sm:$0x3]
  %v44 = vld [vmem:[%s1] sm:$0x1]
  %v45 = vld [vmem:[%s1 + $0x1] sm:$0x1]
  %v46 = vld [vmem:[%s1 + $0x2] sm:$0x1]
  %v47 = vld [vmem:[%s1 + $0x3] sm:$0x1]
  %v48 = vld [vmem:[%s1 + $0x4] sm:$0x1]
  %v49 = vld [vmem:[%s1 + $0x5] sm:$0x1]
  %v50 = vld [vmem:[%s1 + $0x6] sm:$0x1]
  %v51 = vld [vmem:[%s1 + $0x7] sm:$0x1]
  %v52 = vld [vmem:[%s1 + $0x8] sm:$0x1]
  %v53 = vld [vmem:[%s1 + $0x9] sm:$0x1]
  %v54 = vld [vmem:[%s1 + $0xa] sm:$0x1]
  %v55 = vld [vmem:[%s1 + $0xb] sm:$0x1]
  %v56 = vld [vmem:[%s1 + $0xc] sm:$0x1]
  %v57 = vld [vmem:[%s1 + $0xd] sm:$0x1]
  %v58 = vld [vmem:[%s1 + $0xe] sm:$0x1]
  %v59 = vld [vmem:[%s1 + $0xf] sm:$0x1]
  %v60 = vld [vmem:[%s1 + $0x10] sm:$0x1]
  %v61 = vld [vmem:[%s1 + $0x11] sm:$0x1]
  %v62 = vld [vmem:[%s1 + $0x12] sm:$0x1]
  %v63 = vld [vmem:[%s1 + $0x13] sm:$0x1]
  %v64 = vld [vmem:[%s1 + $0x14] sm:$0x1]
  %v65 = vld [vmem:[%s1 + $0x15] sm:$0x1]
  %v66 = vld [vmem:[%s1 + $0x16] sm:$0x1]
  %v67 = vld [vmem:[%s1 + $0x17] sm:$0x1]
  %v76 = vlaneseq
  %v77 = vshrl.u32 %v76, 7
  %v78 = vsub.s32 0, %v77
  %v79 = vrot.slane %v44, %v78
  %v80 = vlaneseq
  %v81 = vshrl.u32 %v80, 7
  %v82 = vsub.s32 0, %v81
  %v83 = vrot.slane %v45, %v82
  %v84 = vlaneseq
  %v85 = vshrl.u32 %v84, 7
  %v86 = vsub.s32 0, %v85
  %v87 = vrot.slane %v46, %v86
  %v88 = vlaneseq
  %v89 = vshrl.u32 %v88, 7
  %v90 = vsub.s32 0, %v89
  %v91 = vrot.slane %v47, %v90
  %v92 = vlaneseq
  %v93 = vshrl.u32 %v92, 7
  %v94 = vsub.s32 0, %v93
  %v95 = vrot.slane %v48, %v94
  %v96 = vlaneseq
  %v97 = vshrl.u32 %v96, 7
  %v98 = vsub.s32 0, %v97
  %v99 = vrot.slane %v49, %v98
  %v100 = vlaneseq
  %v101 = vshrl.u32 %v100, 7
  %v102 = vsub.s32 0, %v101
  %v103 = vrot.slane %v50, %v102
  %v104 = vlaneseq
  %v105 = vshrl.u32 %v104, 7
  %v106 = vsub.s32 0, %v105
  %v107 = vrot.slane %v51, %v106
  %108 = vset.pattern.permute.xlu0 0
  %109 = vperm.xlu0 %108, %v79
  %v110 = vpop.permute.xlu0 %109
  %112 = vset.pattern.permute.xlu0 0
  %113 = vperm.xlu0 %112, %v83
  %v114 = vpop.permute.xlu0 %113
  %116 = vset.pattern.permute.xlu0 0
  %117 = vperm.xlu0 %116, %v87
  %v118 = vpop.permute.xlu0 %117
  %120 = vset.pattern.permute.xlu0 0
  %121 = vperm.xlu0 %120, %v91
  %v122 = vpop.permute.xlu0 %121
  %124 = vset.pattern.permute.xlu0 0
  %125 = vperm.xlu0 %124, %v95
  %v126 = vpop.permute.xlu0 %125
  %128 = vset.pattern.permute.xlu0 0
  %129 = vperm.xlu0 %128, %v99
  %v130 = vpop.permute.xlu0 %129
  %132 = vset.pattern.permute.xlu0 0
  %133 = vperm.xlu0 %132, %v103
  %v134 = vpop.permute.xlu0 %133
  %136 = vset.pattern.permute.xlu0 0
  %137 = vperm.xlu0 %136, %v107
  %v138 = vpop.permute.xlu0 %137
  %v140 = vmul.f32 %v110, %v17
  %v141 = vmul.f32 %v110, %v18
  %v142 = vmul.f32 %v110, %v19
  %v143 = vmul.f32 %v110, %v20
  %v144 = vmul.f32 %v110, %v21
  %v145 = vmul.f32 %v110, %v22
  %v146 = vmul.f32 %v110, %v23
  %v147 = vmul.f32 %v110, %v24
  %v148 = vmul.f32 %v110, %v25
  %v149 = vmul.f32 %v114, %v17
  %v150 = vmul.f32 %v114, %v18
  %v151 = vmul.f32 %v114, %v19
  %v152 = vmul.f32 %v114, %v20
  %v153 = vmul.f32 %v114, %v21
  %v154 = vmul.f32 %v114, %v22
  %v155 = vmul.f32 %v114, %v23
  %v156 = vmul.f32 %v114, %v24
  %v157 = vmul.f32 %v114, %v25
  %v158 = vmul.f32 %v118, %v17
  %v159 = vmul.f32 %v118, %v18
  %v160 = vmul.f32 %v118, %v19
  %v161 = vmul.f32 %v118, %v20
  %v162 = vmul.f32 %v118, %v21
  %v163 = vmul.f32 %v118, %v22
  %v164 = vmul.f32 %v118, %v23
  %v165 = vmul.f32 %v118, %v24
  %v166 = vmul.f32 %v118, %v25
  %v167 = vmul.f32 %v122, %v17
  %v168 = vmul.f32 %v122, %v18
  %v169 = vmul.f32 %v122, %v19
  %v170 = vmul.f32 %v122, %v20
  %v171 = vmul.f32 %v122, %v21
  %v172 = vmul.f32 %v122, %v22
  %v173 = vmul.f32 %v122, %v23
  %v174 = vmul.f32 %v122, %v24
  %v175 = vmul.f32 %v122, %v25
  %v176 = vmul.f32 %v126, %v17
  %v177 = vmul.f32 %v126, %v18
  %v178 = vmul.f32 %v126, %v19
  %v179 = vmul.f32 %v126, %v20
  %v180 = vmul.f32 %v126, %v21
  %v181 = vmul.f32 %v126, %v22
  %v182 = vmul.f32 %v126, %v23
  %v183 = vmul.f32 %v126, %v24
  %v184 = vmul.f32 %v126, %v25
  %v185 = vmul.f32 %v130, %v17
  %v186 = vmul.f32 %v130, %v18
  %v187 = vmul.f32 %v130, %v19
  %v188 = vmul.f32 %v130, %v20
  %v189 = vmul.f32 %v130, %v21
  %v190 = vmul.f32 %v130, %v22
  %v191 = vmul.f32 %v130, %v23
  %v192 = vmul.f32 %v130, %v24
  %v193 = vmul.f32 %v130, %v25
  %v194 = vmul.f32 %v134, %v17
  %v195 = vmul.f32 %v134, %v18
  %v196 = vmul.f32 %v134, %v19
  %v197 = vmul.f32 %v134, %v20
  %v198 = vmul.f32 %v134, %v21
  %v199 = vmul.f32 %v134, %v22
  %v200 = vmul.f32 %v134, %v23
  %v201 = vmul.f32 %v134, %v24
  %v202 = vmul.f32 %v134, %v25
  %v203 = vmul.f32 %v138, %v17
  %v204 = vmul.f32 %v138, %v18
  %v205 = vmul.f32 %v138, %v19
  %v206 = vmul.f32 %v138, %v20
  %v207 = vmul.f32 %v138, %v21
  %v208 = vmul.f32 %v138, %v22
  %v209 = vmul.f32 %v138, %v23
  %v210 = vmul.f32 %v138, %v24
  %v211 = vmul.f32 %v138, %v25
  %v220 = vlaneseq
  %v221 = vshrl.u32 %v220, 7
  %v222 = vsub.s32 0, %v221
  %v223 = vrot.slane %v52, %v222
  %v224 = vlaneseq
  %v225 = vshrl.u32 %v224, 7
  %v226 = vsub.s32 0, %v225
  %v227 = vrot.slane %v53, %v226
  %v228 = vlaneseq
  %v229 = vshrl.u32 %v228, 7
  %v230 = vsub.s32 0, %v229
  %v231 = vrot.slane %v54, %v230
  %v232 = vlaneseq
  %v233 = vshrl.u32 %v232, 7
  %v234 = vsub.s32 0, %v233
  %v235 = vrot.slane %v55, %v234
  %v236 = vlaneseq
  %v237 = vshrl.u32 %v236, 7
  %v238 = vsub.s32 0, %v237
  %v239 = vrot.slane %v56, %v238
  %v240 = vlaneseq
  %v241 = vshrl.u32 %v240, 7
  %v242 = vsub.s32 0, %v241
  %v243 = vrot.slane %v57, %v242
  %v244 = vlaneseq
  %v245 = vshrl.u32 %v244, 7
  %v246 = vsub.s32 0, %v245
  %v247 = vrot.slane %v58, %v246
  %v248 = vlaneseq
  %v249 = vshrl.u32 %v248, 7
  %v250 = vsub.s32 0, %v249
  %v251 = vrot.slane %v59, %v250
  %252 = vset.pattern.permute.xlu0 0
  %253 = vperm.xlu0 %252, %v223
  %v254 = vpop.permute.xlu0 %253
  %256 = vset.pattern.permute.xlu0 0
  %257 = vperm.xlu0 %256, %v227
  %v258 = vpop.permute.xlu0 %257
  %260 = vset.pattern.permute.xlu0 0
  %261 = vperm.xlu0 %260, %v231
  %v262 = vpop.permute.xlu0 %261
  %264 = vset.pattern.permute.xlu0 0
  %265 = vperm.xlu0 %264, %v235
  %v266 = vpop.permute.xlu0 %265
  %268 = vset.pattern.permute.xlu0 0
  %269 = vperm.xlu0 %268, %v239
  %v270 = vpop.permute.xlu0 %269
  %272 = vset.pattern.permute.xlu0 0
  %273 = vperm.xlu0 %272, %v243
  %v274 = vpop.permute.xlu0 %273
  %276 = vset.pattern.permute.xlu0 0
  %277 = vperm.xlu0 %276, %v247
  %v278 = vpop.permute.xlu0 %277
  %280 = vset.pattern.permute.xlu0 0
  %281 = vperm.xlu0 %280, %v251
  %v282 = vpop.permute.xlu0 %281
  %v284 = vmul.f32 %v254, %v26
  %v285 = vmul.f32 %v254, %v27
  %v286 = vmul.f32 %v254, %v28
  %v287 = vmul.f32 %v254, %v29
  %v288 = vmul.f32 %v254, %v30
  %v289 = vmul.f32 %v254, %v31
  %v290 = vmul.f32 %v254, %v32
  %v291 = vmul.f32 %v254, %v33
  %v292 = vmul.f32 %v254, %v34
  %v293 = vmul.f32 %v258, %v26
  %v294 = vmul.f32 %v258, %v27
  %v295 = vmul.f32 %v258, %v28
  %v296 = vmul.f32 %v258, %v29
  %v297 = vmul.f32 %v258, %v30
  %v298 = vmul.f32 %v258, %v31
  %v299 = vmul.f32 %v258, %v32
  %v300 = vmul.f32 %v258, %v33
  %v301 = vmul.f32 %v258, %v34
  %v302 = vmul.f32 %v262, %v26
  %v303 = vmul.f32 %v262, %v27
  %v304 = vmul.f32 %v262, %v28
  %v305 = vmul.f32 %v262, %v29
  %v306 = vmul.f32 %v262, %v30
  %v307 = vmul.f32 %v262, %v31
  %v308 = vmul.f32 %v262, %v32
  %v309 = vmul.f32 %v262, %v33
  %v310 = vmul.f32 %v262, %v34
  %v311 = vmul.f32 %v266, %v26
  %v312 = vmul.f32 %v266, %v27
  %v313 = vmul.f32 %v266, %v28
  %v314 = vmul.f32 %v266, %v29
  %v315 = vmul.f32 %v266, %v30
  %v316 = vmul.f32 %v266, %v31
  %v317 = vmul.f32 %v266, %v32
  %v318 = vmul.f32 %v266, %v33
  %v319 = vmul.f32 %v266, %v34
  %v320 = vmul.f32 %v270, %v26
  %v321 = vmul.f32 %v270, %v27
  %v322 = vmul.f32 %v270, %v28
  %v323 = vmul.f32 %v270, %v29
  %v324 = vmul.f32 %v270, %v30
  %v325 = vmul.f32 %v270, %v31
  %v326 = vmul.f32 %v270, %v32
  %v327 = vmul.f32 %v270, %v33
  %v328 = vmul.f32 %v270, %v34
  %v329 = vmul.f32 %v274, %v26
  %v330 = vmul.f32 %v274, %v27
  %v331 = vmul.f32 %v274, %v28
  %v332 = vmul.f32 %v274, %v29
  %v333 = vmul.f32 %v274, %v30
  %v334 = vmul.f32 %v274, %v31
  %v335 = vmul.f32 %v274, %v32
  %v336 = vmul.f32 %v274, %v33
  %v337 = vmul.f32 %v274, %v34
  %v338 = vmul.f32 %v278, %v26
  %v339 = vmul.f32 %v278, %v27
  %v340 = vmul.f32 %v278, %v28
  %v341 = vmul.f32 %v278, %v29
  %v342 = vmul.f32 %v278, %v30
  %v343 = vmul.f32 %v278, %v31
  %v344 = vmul.f32 %v278, %v32
  %v345 = vmul.f32 %v278, %v33
  %v346 = vmul.f32 %v278, %v34
  %v347 = vmul.f32 %v282, %v26
  %v348 = vmul.f32 %v282, %v27
  %v349 = vmul.f32 %v282, %v28
  %v350 = vmul.f32 %v282, %v29
  %v351 = vmul.f32 %v282, %v30
  %v352 = vmul.f32 %v282, %v31
  %v353 = vmul.f32 %v282, %v32
  %v354 = vmul.f32 %v282, %v33
  %v355 = vmul.f32 %v282, %v34
  %v356 = vadd.f32 %v140, %v284
  %v357 = vadd.f32 %v141, %v285
  %v358 = vadd.f32 %v142, %v286
  %v359 = vadd.f32 %v143, %v287
  %v360 = vadd.f32 %v144, %v288
  %v361 = vadd.f32 %v145, %v289
  %v362 = vadd.f32 %v146, %v290
  %v363 = vadd.f32 %v147, %v291
  %v364 = vadd.f32 %v148, %v292
  %v365 = vadd.f32 %v149, %v293
  %v366 = vadd.f32 %v150, %v294
  %v367 = vadd.f32 %v151, %v295
  %v368 = vadd.f32 %v152, %v296
  %v369 = vadd.f32 %v153, %v297
  %v370 = vadd.f32 %v154, %v298
  %v371 = vadd.f32 %v155, %v299
  %v372 = vadd.f32 %v156, %v300
  %v373 = vadd.f32 %v157, %v301
  %v374 = vadd.f32 %v158, %v302
  %v375 = vadd.f32 %v159, %v303
  %v376 = vadd.f32 %v160, %v304
  %v377 = vadd.f32 %v161, %v305
  %v378 = vadd.f32 %v162, %v306
  %v379 = vadd.f32 %v163, %v307
  %v380 = vadd.f32 %v164, %v308
  %v381 = vadd.f32 %v165, %v309
  %v382 = vadd.f32 %v166, %v310
  %v383 = vadd.f32 %v167, %v311
  %v384 = vadd.f32 %v168, %v312
  %v385 = vadd.f32 %v169, %v313
  %v386 = vadd.f32 %v170, %v314
  %v387 = vadd.f32 %v171, %v315
  %v388 = vadd.f32 %v172, %v316
  %v389 = vadd.f32 %v173, %v317
  %v390 = vadd.f32 %v174, %v318
  %v391 = vadd.f32 %v175, %v319
  %v392 = vadd.f32 %v176, %v320
  %v393 = vadd.f32 %v177, %v321
  %v394 = vadd.f32 %v178, %v322
  %v395 = vadd.f32 %v179, %v323
  %v396 = vadd.f32 %v180, %v324
  %v397 = vadd.f32 %v181, %v325
  %v398 = vadd.f32 %v182, %v326
  %v399 = vadd.f32 %v183, %v327
  %v400 = vadd.f32 %v184, %v328
  %v401 = vadd.f32 %v185, %v329
  %v402 = vadd.f32 %v186, %v330
  %v403 = vadd.f32 %v187, %v331
  %v404 = vadd.f32 %v188, %v332
  %v405 = vadd.f32 %v189, %v333
  %v406 = vadd.f32 %v190, %v334
  %v407 = vadd.f32 %v191, %v335
  %v408 = vadd.f32 %v192, %v336
  %v409 = vadd.f32 %v193, %v337
  %v410 = vadd.f32 %v194, %v338
  %v411 = vadd.f32 %v195, %v339
  %v412 = vadd.f32 %v196, %v340
  %v413 = vadd.f32 %v197, %v341
  %v414 = vadd.f32 %v198, %v342
  %v415 = vadd.f32 %v199, %v343
  %v416 = vadd.f32 %v200, %v344
  %v417 = vadd.f32 %v201, %v345
  %v418 = vadd.f32 %v202, %v346
  %v419 = vadd.f32 %v203, %v347
  %v420 = vadd.f32 %v204, %v348
  %v421 = vadd.f32 %v205, %v349
  %v422 = vadd.f32 %v206, %v350
  %v423 = vadd.f32 %v207, %v351
  %v424 = vadd.f32 %v208, %v352
  %v425 = vadd.f32 %v209, %v353
  %v426 = vadd.f32 %v210, %v354
  %v427 = vadd.f32 %v211, %v355
  %v436 = vlaneseq
  %v437 = vshrl.u32 %v436, 7
  %v438 = vsub.s32 0, %v437
  %v439 = vrot.slane %v60, %v438
  %v440 = vlaneseq
  %v441 = vshrl.u32 %v440, 7
  %v442 = vsub.s32 0, %v441
  %v443 = vrot.slane %v61, %v442
  %v444 = vlaneseq
  %v445 = vshrl.u32 %v444, 7
  %v446 = vsub.s32 0, %v445
  %v447 = vrot.slane %v62, %v446
  %v448 = vlaneseq
  %v449 = vshrl.u32 %v448, 7
  %v450 = vsub.s32 0, %v449
  %v451 = vrot.slane %v63, %v450
  %v452 = vlaneseq
  %v453 = vshrl.u32 %v452, 7
  %v454 = vsub.s32 0, %v453
  %v455 = vrot.slane %v64, %v454
  %v456 = vlaneseq
  %v457 = vshrl.u32 %v456, 7
  %v458 = vsub.s32 0, %v457
  %v459 = vrot.slane %v65, %v458
  %v460 = vlaneseq
  %v461 = vshrl.u32 %v460, 7
  %v462 = vsub.s32 0, %v461
  %v463 = vrot.slane %v66, %v462
  %v464 = vlaneseq
  %v465 = vshrl.u32 %v464, 7
  %v466 = vsub.s32 0, %v465
  %v467 = vrot.slane %v67, %v466
  %468 = vset.pattern.permute.xlu0 0
  %469 = vperm.xlu0 %468, %v439
  %v470 = vpop.permute.xlu0 %469
  %472 = vset.pattern.permute.xlu0 0
  %473 = vperm.xlu0 %472, %v443
  %v474 = vpop.permute.xlu0 %473
  %476 = vset.pattern.permute.xlu0 0
  %477 = vperm.xlu0 %476, %v447
  %v478 = vpop.permute.xlu0 %477
  %480 = vset.pattern.permute.xlu0 0
  %481 = vperm.xlu0 %480, %v451
  %v482 = vpop.permute.xlu0 %481
  %484 = vset.pattern.permute.xlu0 0
  %485 = vperm.xlu0 %484, %v455
  %v486 = vpop.permute.xlu0 %485
  %488 = vset.pattern.permute.xlu0 0
  %489 = vperm.xlu0 %488, %v459
  %v490 = vpop.permute.xlu0 %489
  %492 = vset.pattern.permute.xlu0 0
  %493 = vperm.xlu0 %492, %v463
  %v494 = vpop.permute.xlu0 %493
  %496 = vset.pattern.permute.xlu0 0
  %497 = vperm.xlu0 %496, %v467
  %v498 = vpop.permute.xlu0 %497
  %v500 = vmul.f32 %v470, %v35
  %v501 = vmul.f32 %v470, %v36
  %v502 = vmul.f32 %v470, %v37
  %v503 = vmul.f32 %v470, %v38
  %v504 = vmul.f32 %v470, %v39
  %v505 = vmul.f32 %v470, %v40
  %v506 = vmul.f32 %v470, %v41
  %v507 = vmul.f32 %v470, %v42
  %v508 = vmul.f32 %v470, %v43
  %v509 = vmul.f32 %v474, %v35
  %v510 = vmul.f32 %v474, %v36
  %v511 = vmul.f32 %v474, %v37
  %v512 = vmul.f32 %v474, %v38
  %v513 = vmul.f32 %v474, %v39
  %v514 = vmul.f32 %v474, %v40
  %v515 = vmul.f32 %v474, %v41
  %v516 = vmul.f32 %v474, %v42
  %v517 = vmul.f32 %v474, %v43
  %v518 = vmul.f32 %v478, %v35
  %v519 = vmul.f32 %v478, %v36
  %v520 = vmul.f32 %v478, %v37
  %v521 = vmul.f32 %v478, %v38
  %v522 = vmul.f32 %v478, %v39
  %v523 = vmul.f32 %v478, %v40
  %v524 = vmul.f32 %v478, %v41
  %v525 = vmul.f32 %v478, %v42
  %v526 = vmul.f32 %v478, %v43
  %v527 = vmul.f32 %v482, %v35
  %v528 = vmul.f32 %v482, %v36
  %v529 = vmul.f32 %v482, %v37
  %v530 = vmul.f32 %v482, %v38
  %v531 = vmul.f32 %v482, %v39
  %v532 = vmul.f32 %v482, %v40
  %v533 = vmul.f32 %v482, %v41
  %v534 = vmul.f32 %v482, %v42
  %v535 = vmul.f32 %v482, %v43
  %v536 = vmul.f32 %v486, %v35
  %v537 = vmul.f32 %v486, %v36
  %v538 = vmul.f32 %v486, %v37
  %v539 = vmul.f32 %v486, %v38
  %v540 = vmul.f32 %v486, %v39
  %v541 = vmul.f32 %v486, %v40
  %v542 = vmul.f32 %v486, %v41
  %v543 = vmul.f32 %v486, %v42
  %v544 = vmul.f32 %v486, %v43
  %v545 = vmul.f32 %v490, %v35
  %v546 = vmul.f32 %v490, %v36
  %v547 = vmul.f32 %v490, %v37
  %v548 = vmul.f32 %v490, %v38
  %v549 = vmul.f32 %v490, %v39
  %v550 = vmul.f32 %v490, %v40
  %v551 = vmul.f32 %v490, %v41
  %v552 = vmul.f32 %v490, %v42
  %v553 = vmul.f32 %v490, %v43
  %v554 = vmul.f32 %v494, %v35
  %v555 = vmul.f32 %v494, %v36
  %v556 = vmul.f32 %v494, %v37
  %v557 = vmul.f32 %v494, %v38
  %v558 = vmul.f32 %v494, %v39
  %v559 = vmul.f32 %v494, %v40
  %v560 = vmul.f32 %v494, %v41
  %v561 = vmul.f32 %v494, %v42
  %v562 = vmul.f32 %v494, %v43
  %v563 = vmul.f32 %v498, %v35
  %v564 = vmul.f32 %v498, %v36
  %v565 = vmul.f32 %v498, %v37
  %v566 = vmul.f32 %v498, %v38
  %v567 = vmul.f32 %v498, %v39
  %v568 = vmul.f32 %v498, %v40
  %v569 = vmul.f32 %v498, %v41
  %v570 = vmul.f32 %v498, %v42
  %v571 = vmul.f32 %v498, %v43
  %v572 = vadd.f32 %v356, %v500
  %v573 = vadd.f32 %v357, %v501
  %v574 = vadd.f32 %v358, %v502
  %v575 = vadd.f32 %v359, %v503
  %v576 = vadd.f32 %v360, %v504
  %v577 = vadd.f32 %v361, %v505
  %v578 = vadd.f32 %v362, %v506
  %v579 = vadd.f32 %v363, %v507
  %v580 = vadd.f32 %v364, %v508
  %v581 = vadd.f32 %v365, %v509
  %v582 = vadd.f32 %v366, %v510
  %v583 = vadd.f32 %v367, %v511
  %v584 = vadd.f32 %v368, %v512
  %v585 = vadd.f32 %v369, %v513
  %v586 = vadd.f32 %v370, %v514
  %v587 = vadd.f32 %v371, %v515
  %v588 = vadd.f32 %v372, %v516
  %v589 = vadd.f32 %v373, %v517
  %v590 = vadd.f32 %v374, %v518
  %v591 = vadd.f32 %v375, %v519
  %v592 = vadd.f32 %v376, %v520
  %v593 = vadd.f32 %v377, %v521
  %v594 = vadd.f32 %v378, %v522
  %v595 = vadd.f32 %v379, %v523
  %v596 = vadd.f32 %v380, %v524
  %v597 = vadd.f32 %v381, %v525
  %v598 = vadd.f32 %v382, %v526
  %v599 = vadd.f32 %v383, %v527
  %v600 = vadd.f32 %v384, %v528
  %v601 = vadd.f32 %v385, %v529
  %v602 = vadd.f32 %v386, %v530
  %v603 = vadd.f32 %v387, %v531
  %v604 = vadd.f32 %v388, %v532
  %v605 = vadd.f32 %v389, %v533
  %v606 = vadd.f32 %v390, %v534
  %v607 = vadd.f32 %v391, %v535
  %v608 = vadd.f32 %v392, %v536
  %v609 = vadd.f32 %v393, %v537
  %v610 = vadd.f32 %v394, %v538
  %v611 = vadd.f32 %v395, %v539
  %v612 = vadd.f32 %v396, %v540
  %v613 = vadd.f32 %v397, %v541
  %v614 = vadd.f32 %v398, %v542
  %v615 = vadd.f32 %v399, %v543
  %v616 = vadd.f32 %v400, %v544
  %v617 = vadd.f32 %v401, %v545
  %v618 = vadd.f32 %v402, %v546
  %v619 = vadd.f32 %v403, %v547
  %v620 = vadd.f32 %v404, %v548
  %v621 = vadd.f32 %v405, %v549
  %v622 = vadd.f32 %v406, %v550
  %v623 = vadd.f32 %v407, %v551
  %v624 = vadd.f32 %v408, %v552
  %v625 = vadd.f32 %v409, %v553
  %v626 = vadd.f32 %v410, %v554
  %v627 = vadd.f32 %v411, %v555
  %v628 = vadd.f32 %v412, %v556
  %v629 = vadd.f32 %v413, %v557
  %v630 = vadd.f32 %v414, %v558
  %v631 = vadd.f32 %v415, %v559
  %v632 = vadd.f32 %v416, %v560
  %v633 = vadd.f32 %v417, %v561
  %v634 = vadd.f32 %v418, %v562
  %v635 = vadd.f32 %v419, %v563
  %v636 = vadd.f32 %v420, %v564
  %v637 = vadd.f32 %v421, %v565
  %v638 = vadd.f32 %v422, %v566
  %v639 = vadd.f32 %v423, %v567
  %v640 = vadd.f32 %v424, %v568
  %v641 = vadd.f32 %v425, %v569
  %v642 = vadd.f32 %v426, %v570
  %v643 = vadd.f32 %v427, %v571
  %vm644 = vcmask 539648
  %v645 = vsel %vm644, %v572, 0.0
  %646 = vadd.xlane.f32.xlu0 %v645
  %v647 = vpop.xlane.xlu0 %646
  %v648 = vsel %vm644, %v573, 0.0
  %649 = vadd.xlane.f32.xlu0 %v648
  %v650 = vpop.xlane.xlu0 %649
  %v651 = vsel %vm644, %v574, 0.0
  %652 = vadd.xlane.f32.xlu0 %v651
  %v653 = vpop.xlane.xlu0 %652
  %v654 = vsel %vm644, %v575, 0.0
  %655 = vadd.xlane.f32.xlu0 %v654
  %v656 = vpop.xlane.xlu0 %655
  %v657 = vsel %vm644, %v576, 0.0
  %658 = vadd.xlane.f32.xlu0 %v657
  %v659 = vpop.xlane.xlu0 %658
  %v660 = vsel %vm644, %v577, 0.0
  %661 = vadd.xlane.f32.xlu0 %v660
  %v662 = vpop.xlane.xlu0 %661
  %v663 = vsel %vm644, %v578, 0.0
  %664 = vadd.xlane.f32.xlu0 %v663
  %v665 = vpop.xlane.xlu0 %664
  %v666 = vsel %vm644, %v579, 0.0
  %667 = vadd.xlane.f32.xlu0 %v666
  %v668 = vpop.xlane.xlu0 %667
  %vm669 = vcmask 533504
  %v670 = vsel %vm669, %v580, 0.0
  %671 = vadd.xlane.f32.xlu0 %v670
  %v672 = vpop.xlane.xlu0 %671
  %v673 = vsel %vm644, %v581, 0.0
  %674 = vadd.xlane.f32.xlu0 %v673
  %v675 = vpop.xlane.xlu0 %674
  %v676 = vsel %vm644, %v582, 0.0
  %677 = vadd.xlane.f32.xlu0 %v676
  %v678 = vpop.xlane.xlu0 %677
  %v679 = vsel %vm644, %v583, 0.0
  %680 = vadd.xlane.f32.xlu0 %v679
  %v681 = vpop.xlane.xlu0 %680
  %v682 = vsel %vm644, %v584, 0.0
  %683 = vadd.xlane.f32.xlu0 %v682
  %v684 = vpop.xlane.xlu0 %683
  %v685 = vsel %vm644, %v585, 0.0
  %686 = vadd.xlane.f32.xlu0 %v685
  %v687 = vpop.xlane.xlu0 %686
  %v688 = vsel %vm644, %v586, 0.0
  %689 = vadd.xlane.f32.xlu0 %v688
  %v690 = vpop.xlane.xlu0 %689
  %v691 = vsel %vm644, %v587, 0.0
  %692 = vadd.xlane.f32.xlu0 %v691
  %v693 = vpop.xlane.xlu0 %692
  %v694 = vsel %vm644, %v588, 0.0
  %695 = vadd.xlane.f32.xlu0 %v694
  %v696 = vpop.xlane.xlu0 %695
  %v697 = vsel %vm669, %v589, 0.0
  %698 = vadd.xlane.f32.xlu0 %v697
  %v699 = vpop.xlane.xlu0 %698
  %v700 = vsel %vm644, %v590, 0.0
  %701 = vadd.xlane.f32.xlu0 %v700
  %v702 = vpop.xlane.xlu0 %701
  %v703 = vsel %vm644, %v591, 0.0
  %704 = vadd.xlane.f32.xlu0 %v703
  %v705 = vpop.xlane.xlu0 %704
  %v706 = vsel %vm644, %v592, 0.0
  %707 = vadd.xlane.f32.xlu0 %v706
  %v708 = vpop.xlane.xlu0 %707
  %v709 = vsel %vm644, %v593, 0.0
  %710 = vadd.xlane.f32.xlu0 %v709
  %v711 = vpop.xlane.xlu0 %710
  %v712 = vsel %vm644, %v594, 0.0
  %713 = vadd.xlane.f32.xlu0 %v712
  %v714 = vpop.xlane.xlu0 %713
  %v715 = vsel %vm644, %v595, 0.0
  %716 = vadd.xlane.f32.xlu0 %v715
  %v717 = vpop.xlane.xlu0 %716
  %v718 = vsel %vm644, %v596, 0.0
  %719 = vadd.xlane.f32.xlu0 %v718
  %v720 = vpop.xlane.xlu0 %719
  %v721 = vsel %vm644, %v597, 0.0
  %722 = vadd.xlane.f32.xlu0 %v721
  %v723 = vpop.xlane.xlu0 %722
  %v724 = vsel %vm669, %v598, 0.0
  %725 = vadd.xlane.f32.xlu0 %v724
  %v726 = vpop.xlane.xlu0 %725
  %v727 = vsel %vm644, %v599, 0.0
  %728 = vadd.xlane.f32.xlu0 %v727
  %v729 = vpop.xlane.xlu0 %728
  %v730 = vsel %vm644, %v600, 0.0
  %731 = vadd.xlane.f32.xlu0 %v730
  %v732 = vpop.xlane.xlu0 %731
  %v733 = vsel %vm644, %v601, 0.0
  %734 = vadd.xlane.f32.xlu0 %v733
  %v735 = vpop.xlane.xlu0 %734
  %v736 = vsel %vm644, %v602, 0.0
  %737 = vadd.xlane.f32.xlu0 %v736
  %v738 = vpop.xlane.xlu0 %737
  %v739 = vsel %vm644, %v603, 0.0
  %740 = vadd.xlane.f32.xlu0 %v739
  %v741 = vpop.xlane.xlu0 %740
  %v742 = vsel %vm644, %v604, 0.0
  %743 = vadd.xlane.f32.xlu0 %v742
  %v744 = vpop.xlane.xlu0 %743
  %v745 = vsel %vm644, %v605, 0.0
  %746 = vadd.xlane.f32.xlu0 %v745
  %v747 = vpop.xlane.xlu0 %746
  %v748 = vsel %vm644, %v606, 0.0
  %749 = vadd.xlane.f32.xlu0 %v748
  %v750 = vpop.xlane.xlu0 %749
  %v751 = vsel %vm669, %v607, 0.0
  %752 = vadd.xlane.f32.xlu0 %v751
  %v753 = vpop.xlane.xlu0 %752
  %v754 = vsel %vm644, %v608, 0.0
  %755 = vadd.xlane.f32.xlu0 %v754
  %v756 = vpop.xlane.xlu0 %755
  %v757 = vsel %vm644, %v609, 0.0
  %758 = vadd.xlane.f32.xlu0 %v757
  %v759 = vpop.xlane.xlu0 %758
  %v760 = vsel %vm644, %v610, 0.0
  %761 = vadd.xlane.f32.xlu0 %v760
  %v762 = vpop.xlane.xlu0 %761
  %v763 = vsel %vm644, %v611, 0.0
  %764 = vadd.xlane.f32.xlu0 %v763
  %v765 = vpop.xlane.xlu0 %764
  %v766 = vsel %vm644, %v612, 0.0
  %767 = vadd.xlane.f32.xlu0 %v766
  %v768 = vpop.xlane.xlu0 %767
  %v769 = vsel %vm644, %v613, 0.0
  %770 = vadd.xlane.f32.xlu0 %v769
  %v771 = vpop.xlane.xlu0 %770
  %v772 = vsel %vm644, %v614, 0.0
  %773 = vadd.xlane.f32.xlu0 %v772
  %v774 = vpop.xlane.xlu0 %773
  %v775 = vsel %vm644, %v615, 0.0
  %776 = vadd.xlane.f32.xlu0 %v775
  %v777 = vpop.xlane.xlu0 %776
  %v778 = vsel %vm669, %v616, 0.0
  %779 = vadd.xlane.f32.xlu0 %v778
  %v780 = vpop.xlane.xlu0 %779
  %v781 = vsel %vm644, %v617, 0.0
  %782 = vadd.xlane.f32.xlu0 %v781
  %v783 = vpop.xlane.xlu0 %782
  %v784 = vsel %vm644, %v618, 0.0
  %785 = vadd.xlane.f32.xlu0 %v784
  %v786 = vpop.xlane.xlu0 %785
  %v787 = vsel %vm644, %v619, 0.0
  %788 = vadd.xlane.f32.xlu0 %v787
  %v789 = vpop.xlane.xlu0 %788
  %v790 = vsel %vm644, %v620, 0.0
  %791 = vadd.xlane.f32.xlu0 %v790
  %v792 = vpop.xlane.xlu0 %791
  %v793 = vsel %vm644, %v621, 0.0
  %794 = vadd.xlane.f32.xlu0 %v793
  %v795 = vpop.xlane.xlu0 %794
  %v796 = vsel %vm644, %v622, 0.0
  %797 = vadd.xlane.f32.xlu0 %v796
  %v798 = vpop.xlane.xlu0 %797
  %v799 = vsel %vm644, %v623, 0.0
  %800 = vadd.xlane.f32.xlu0 %v799
  %v801 = vpop.xlane.xlu0 %800
  %v802 = vsel %vm644, %v624, 0.0
  %803 = vadd.xlane.f32.xlu0 %v802
  %v804 = vpop.xlane.xlu0 %803
  %v805 = vsel %vm669, %v625, 0.0
  %806 = vadd.xlane.f32.xlu0 %v805
  %v807 = vpop.xlane.xlu0 %806
  %v808 = vsel %vm644, %v626, 0.0
  %809 = vadd.xlane.f32.xlu0 %v808
  %v810 = vpop.xlane.xlu0 %809
  %v811 = vsel %vm644, %v627, 0.0
  %812 = vadd.xlane.f32.xlu0 %v811
  %v813 = vpop.xlane.xlu0 %812
  %v814 = vsel %vm644, %v628, 0.0
  %815 = vadd.xlane.f32.xlu0 %v814
  %v816 = vpop.xlane.xlu0 %815
  %v817 = vsel %vm644, %v629, 0.0
  %818 = vadd.xlane.f32.xlu0 %v817
  %v819 = vpop.xlane.xlu0 %818
  %v820 = vsel %vm644, %v630, 0.0
  %821 = vadd.xlane.f32.xlu0 %v820
  %v822 = vpop.xlane.xlu0 %821
  %v823 = vsel %vm644, %v631, 0.0
  %824 = vadd.xlane.f32.xlu0 %v823
  %v825 = vpop.xlane.xlu0 %824
  %v826 = vsel %vm644, %v632, 0.0
  %827 = vadd.xlane.f32.xlu0 %v826
  %v828 = vpop.xlane.xlu0 %827
  %v829 = vsel %vm644, %v633, 0.0
  %830 = vadd.xlane.f32.xlu0 %v829
  %v831 = vpop.xlane.xlu0 %830
  %v832 = vsel %vm669, %v634, 0.0
  %833 = vadd.xlane.f32.xlu0 %v832
  %v834 = vpop.xlane.xlu0 %833
  %v835 = vsel %vm644, %v635, 0.0
  %836 = vadd.xlane.f32.xlu0 %v835
  %v837 = vpop.xlane.xlu0 %836
  %v838 = vsel %vm644, %v636, 0.0
  %839 = vadd.xlane.f32.xlu0 %v838
  %v840 = vpop.xlane.xlu0 %839
  %v841 = vsel %vm644, %v637, 0.0
  %842 = vadd.xlane.f32.xlu0 %v841
  %v843 = vpop.xlane.xlu0 %842
  %v844 = vsel %vm644, %v638, 0.0
  %845 = vadd.xlane.f32.xlu0 %v844
  %v846 = vpop.xlane.xlu0 %845
  %v847 = vsel %vm644, %v639, 0.0
  %848 = vadd.xlane.f32.xlu0 %v847
  %v849 = vpop.xlane.xlu0 %848
  %v850 = vsel %vm644, %v640, 0.0
  %851 = vadd.xlane.f32.xlu0 %v850
  %v852 = vpop.xlane.xlu0 %851
  %v853 = vsel %vm644, %v641, 0.0
  %854 = vadd.xlane.f32.xlu0 %v853
  %v855 = vpop.xlane.xlu0 %854
  %v856 = vsel %vm644, %v642, 0.0
  %857 = vadd.xlane.f32.xlu0 %v856
  %v858 = vpop.xlane.xlu0 %857
  %v859 = vsel %vm669, %v643, 0.0
  %860 = vadd.xlane.f32.xlu0 %v859
  %v861 = vpop.xlane.xlu0 %860
  %v862 = vadd.f32 %v647, %v650
  %v863 = vadd.f32 %v862, %v653
  %v864 = vadd.f32 %v863, %v656
  %v865 = vadd.f32 %v864, %v659
  %v866 = vadd.f32 %v865, %v662
  %v867 = vadd.f32 %v866, %v665
  %v868 = vadd.f32 %v867, %v668
  %vm869 = vcmask 1041408
  %v870 = vsel %vm869, %v672, 0.0
  %v871 = vadd.f32 %v868, %v870
  %v872 = vrot.slane %v871, 4
  %v873 = vadd.f32 %v871, %v872
  %v874 = vrot.slane %v873, 2
  %v875 = vadd.f32 %v873, %v874
  %v876 = vrot.slane %v875, 1
  %v877 = vadd.f32 %v875, %v876
  %v878 = vadd.f32 %v675, %v678
  %v879 = vadd.f32 %v878, %v681
  %v880 = vadd.f32 %v879, %v684
  %v881 = vadd.f32 %v880, %v687
  %v882 = vadd.f32 %v881, %v690
  %v883 = vadd.f32 %v882, %v693
  %v884 = vadd.f32 %v883, %v696
  %v885 = vsel %vm869, %v699, 0.0
  %v886 = vadd.f32 %v884, %v885
  %v887 = vrot.slane %v886, 4
  %v888 = vadd.f32 %v886, %v887
  %v889 = vrot.slane %v888, 2
  %v890 = vadd.f32 %v888, %v889
  %v891 = vrot.slane %v890, 1
  %v892 = vadd.f32 %v890, %v891
  %v893 = vadd.f32 %v702, %v705
  %v894 = vadd.f32 %v893, %v708
  %v895 = vadd.f32 %v894, %v711
  %v896 = vadd.f32 %v895, %v714
  %v897 = vadd.f32 %v896, %v717
  %v898 = vadd.f32 %v897, %v720
  %v899 = vadd.f32 %v898, %v723
  %v900 = vsel %vm869, %v726, 0.0
  %v901 = vadd.f32 %v899, %v900
  %v902 = vrot.slane %v901, 4
  %v903 = vadd.f32 %v901, %v902
  %v904 = vrot.slane %v903, 2
  %v905 = vadd.f32 %v903, %v904
  %v906 = vrot.slane %v905, 1
  %v907 = vadd.f32 %v905, %v906
  %v908 = vadd.f32 %v729, %v732
  %v909 = vadd.f32 %v908, %v735
  %v910 = vadd.f32 %v909, %v738
  %v911 = vadd.f32 %v910, %v741
  %v912 = vadd.f32 %v911, %v744
  %v913 = vadd.f32 %v912, %v747
  %v914 = vadd.f32 %v913, %v750
  %v915 = vsel %vm869, %v753, 0.0
  %v916 = vadd.f32 %v914, %v915
  %v917 = vrot.slane %v916, 4
  %v918 = vadd.f32 %v916, %v917
  %v919 = vrot.slane %v918, 2
  %v920 = vadd.f32 %v918, %v919
  %v921 = vrot.slane %v920, 1
  %v922 = vadd.f32 %v920, %v921
  %v923 = vadd.f32 %v756, %v759
  %v924 = vadd.f32 %v923, %v762
  %v925 = vadd.f32 %v924, %v765
  %v926 = vadd.f32 %v925, %v768
  %v927 = vadd.f32 %v926, %v771
  %v928 = vadd.f32 %v927, %v774
  %v929 = vadd.f32 %v928, %v777
  %v930 = vsel %vm869, %v780, 0.0
  %v931 = vadd.f32 %v929, %v930
  %v932 = vrot.slane %v931, 4
  %v933 = vadd.f32 %v931, %v932
  %v934 = vrot.slane %v933, 2
  %v935 = vadd.f32 %v933, %v934
  %v936 = vrot.slane %v935, 1
  %v937 = vadd.f32 %v935, %v936
  %v938 = vadd.f32 %v783, %v786
  %v939 = vadd.f32 %v938, %v789
  %v940 = vadd.f32 %v939, %v792
  %v941 = vadd.f32 %v940, %v795
  %v942 = vadd.f32 %v941, %v798
  %v943 = vadd.f32 %v942, %v801
  %v944 = vadd.f32 %v943, %v804
  %v945 = vsel %vm869, %v807, 0.0
  %v946 = vadd.f32 %v944, %v945
  %v947 = vrot.slane %v946, 4
  %v948 = vadd.f32 %v946, %v947
  %v949 = vrot.slane %v948, 2
  %v950 = vadd.f32 %v948, %v949
  %v951 = vrot.slane %v950, 1
  %v952 = vadd.f32 %v950, %v951
  %v953 = vadd.f32 %v810, %v813
  %v954 = vadd.f32 %v953, %v816
  %v955 = vadd.f32 %v954, %v819
  %v956 = vadd.f32 %v955, %v822
  %v957 = vadd.f32 %v956, %v825
  %v958 = vadd.f32 %v957, %v828
  %v959 = vadd.f32 %v958, %v831
  %v960 = vsel %vm869, %v834, 0.0
  %v961 = vadd.f32 %v959, %v960
  %v962 = vrot.slane %v961, 4
  %v963 = vadd.f32 %v961, %v962
  %v964 = vrot.slane %v963, 2
  %v965 = vadd.f32 %v963, %v964
  %v966 = vrot.slane %v965, 1
  %v967 = vadd.f32 %v965, %v966
  %v968 = vadd.f32 %v837, %v840
  %v969 = vadd.f32 %v968, %v843
  %v970 = vadd.f32 %v969, %v846
  %v971 = vadd.f32 %v970, %v849
  %v972 = vadd.f32 %v971, %v852
  %v973 = vadd.f32 %v972, %v855
  %v974 = vadd.f32 %v973, %v858
  %v975 = vsel %vm869, %v861, 0.0
  %v976 = vadd.f32 %v974, %v975
  %v977 = vrot.slane %v976, 4
  %v978 = vadd.f32 %v976, %v977
  %v979 = vrot.slane %v978, 2
  %v980 = vadd.f32 %v978, %v979
  %v981 = vrot.slane %v980, 1
  %v982 = vadd.f32 %v980, %v981
  %v983 = vmul.f32 %v572, %v572
  %v984 = vmul.f32 %v573, %v573
  %v985 = vmul.f32 %v574, %v574
  %v986 = vmul.f32 %v575, %v575
  %v987 = vmul.f32 %v576, %v576
  %v988 = vmul.f32 %v577, %v577
  %v989 = vmul.f32 %v578, %v578
  %v990 = vmul.f32 %v579, %v579
  %v991 = vmul.f32 %v580, %v580
  %v992 = vmul.f32 %v581, %v581
  %v993 = vmul.f32 %v582, %v582
  %v994 = vmul.f32 %v583, %v583
  %v995 = vmul.f32 %v584, %v584
  %v996 = vmul.f32 %v585, %v585
  %v997 = vmul.f32 %v586, %v586
  %v998 = vmul.f32 %v587, %v587
  %v999 = vmul.f32 %v588, %v588
  %v1000 = vmul.f32 %v589, %v589
  %v1001 = vmul.f32 %v590, %v590
  %v1002 = vmul.f32 %v591, %v591
  %v1003 = vmul.f32 %v592, %v592
  %v1004 = vmul.f32 %v593, %v593
  %v1005 = vmul.f32 %v594, %v594
  %v1006 = vmul.f32 %v595, %v595
  %v1007 = vmul.f32 %v596, %v596
  %v1008 = vmul.f32 %v597, %v597
  %v1009 = vmul.f32 %v598, %v598
  %v1010 = vmul.f32 %v599, %v599
  %v1011 = vmul.f32 %v600, %v600
  %v1012 = vmul.f32 %v601, %v601
  %v1013 = vmul.f32 %v602, %v602
  %v1014 = vmul.f32 %v603, %v603
  %v1015 = vmul.f32 %v604, %v604
  %v1016 = vmul.f32 %v605, %v605
  %v1017 = vmul.f32 %v606, %v606
  %v1018 = vmul.f32 %v607, %v607
  %v1019 = vmul.f32 %v608, %v608
  %v1020 = vmul.f32 %v609, %v609
  %v1021 = vmul.f32 %v610, %v610
  %v1022 = vmul.f32 %v611, %v611
  %v1023 = vmul.f32 %v612, %v612
  %v1024 = vmul.f32 %v613, %v613
  %v1025 = vmul.f32 %v614, %v614
  %v1026 = vmul.f32 %v615, %v615
  %v1027 = vmul.f32 %v616, %v616
  %v1028 = vmul.f32 %v617, %v617
  %v1029 = vmul.f32 %v618, %v618
  %v1030 = vmul.f32 %v619, %v619
  %v1031 = vmul.f32 %v620, %v620
  %v1032 = vmul.f32 %v621, %v621
  %v1033 = vmul.f32 %v622, %v622
  %v1034 = vmul.f32 %v623, %v623
  %v1035 = vmul.f32 %v624, %v624
  %v1036 = vmul.f32 %v625, %v625
  %v1037 = vmul.f32 %v626, %v626
  %v1038 = vmul.f32 %v627, %v627
  %v1039 = vmul.f32 %v628, %v628
  %v1040 = vmul.f32 %v629, %v629
  %v1041 = vmul.f32 %v630, %v630
  %v1042 = vmul.f32 %v631, %v631
  %v1043 = vmul.f32 %v632, %v632
  %v1044 = vmul.f32 %v633, %v633
  %v1045 = vmul.f32 %v634, %v634
  %v1046 = vmul.f32 %v635, %v635
  %v1047 = vmul.f32 %v636, %v636
  %v1048 = vmul.f32 %v637, %v637
  %v1049 = vmul.f32 %v638, %v638
  %v1050 = vmul.f32 %v639, %v639
  %v1051 = vmul.f32 %v640, %v640
  %v1052 = vmul.f32 %v641, %v641
  %v1053 = vmul.f32 %v642, %v642
  %v1054 = vmul.f32 %v643, %v643
  %v1055 = vsel %vm644, %v983, 0.0
  %1056 = vadd.xlane.f32.xlu0 %v1055
  %v1057 = vpop.xlane.xlu0 %1056
  %v1058 = vsel %vm644, %v984, 0.0
  %1059 = vadd.xlane.f32.xlu0 %v1058
  %v1060 = vpop.xlane.xlu0 %1059
  %v1061 = vsel %vm644, %v985, 0.0
  %1062 = vadd.xlane.f32.xlu0 %v1061
  %v1063 = vpop.xlane.xlu0 %1062
  %v1064 = vsel %vm644, %v986, 0.0
  %1065 = vadd.xlane.f32.xlu0 %v1064
  %v1066 = vpop.xlane.xlu0 %1065
  %v1067 = vsel %vm644, %v987, 0.0
  %1068 = vadd.xlane.f32.xlu0 %v1067
  %v1069 = vpop.xlane.xlu0 %1068
  %v1070 = vsel %vm644, %v988, 0.0
  %1071 = vadd.xlane.f32.xlu0 %v1070
  %v1072 = vpop.xlane.xlu0 %1071
  %v1073 = vsel %vm644, %v989, 0.0
  %1074 = vadd.xlane.f32.xlu0 %v1073
  %v1075 = vpop.xlane.xlu0 %1074
  %v1076 = vsel %vm644, %v990, 0.0
  %1077 = vadd.xlane.f32.xlu0 %v1076
  %v1078 = vpop.xlane.xlu0 %1077
  %v1079 = vsel %vm669, %v991, 0.0
  %1080 = vadd.xlane.f32.xlu0 %v1079
  %v1081 = vpop.xlane.xlu0 %1080
  %v1082 = vsel %vm644, %v992, 0.0
  %1083 = vadd.xlane.f32.xlu0 %v1082
  %v1084 = vpop.xlane.xlu0 %1083
  %v1085 = vsel %vm644, %v993, 0.0
  %1086 = vadd.xlane.f32.xlu0 %v1085
  %v1087 = vpop.xlane.xlu0 %1086
  %v1088 = vsel %vm644, %v994, 0.0
  %1089 = vadd.xlane.f32.xlu0 %v1088
  %v1090 = vpop.xlane.xlu0 %1089
  %v1091 = vsel %vm644, %v995, 0.0
  %1092 = vadd.xlane.f32.xlu0 %v1091
  %v1093 = vpop.xlane.xlu0 %1092
  %v1094 = vsel %vm644, %v996, 0.0
  %1095 = vadd.xlane.f32.xlu0 %v1094
  %v1096 = vpop.xlane.xlu0 %1095
  %v1097 = vsel %vm644, %v997, 0.0
  %1098 = vadd.xlane.f32.xlu0 %v1097
  %v1099 = vpop.xlane.xlu0 %1098
  %v1100 = vsel %vm644, %v998, 0.0
  %1101 = vadd.xlane.f32.xlu0 %v1100
  %v1102 = vpop.xlane.xlu0 %1101
  %v1103 = vsel %vm644, %v999, 0.0
  %1104 = vadd.xlane.f32.xlu0 %v1103
  %v1105 = vpop.xlane.xlu0 %1104
  %v1106 = vsel %vm669, %v1000, 0.0
  %1107 = vadd.xlane.f32.xlu0 %v1106
  %v1108 = vpop.xlane.xlu0 %1107
  %v1109 = vsel %vm644, %v1001, 0.0
  %1110 = vadd.xlane.f32.xlu0 %v1109
  %v1111 = vpop.xlane.xlu0 %1110
  %v1112 = vsel %vm644, %v1002, 0.0
  %1113 = vadd.xlane.f32.xlu0 %v1112
  %v1114 = vpop.xlane.xlu0 %1113
  %v1115 = vsel %vm644, %v1003, 0.0
  %1116 = vadd.xlane.f32.xlu0 %v1115
  %v1117 = vpop.xlane.xlu0 %1116
  %v1118 = vsel %vm644, %v1004, 0.0
  %1119 = vadd.xlane.f32.xlu0 %v1118
  %v1120 = vpop.xlane.xlu0 %1119
  %v1121 = vsel %vm644, %v1005, 0.0
  %1122 = vadd.xlane.f32.xlu0 %v1121
  %v1123 = vpop.xlane.xlu0 %1122
  %v1124 = vsel %vm644, %v1006, 0.0
  %1125 = vadd.xlane.f32.xlu0 %v1124
  %v1126 = vpop.xlane.xlu0 %1125
  %v1127 = vsel %vm644, %v1007, 0.0
  %1128 = vadd.xlane.f32.xlu0 %v1127
  %v1129 = vpop.xlane.xlu0 %1128
  %v1130 = vsel %vm644, %v1008, 0.0
  %1131 = vadd.xlane.f32.xlu0 %v1130
  %v1132 = vpop.xlane.xlu0 %1131
  %v1133 = vsel %vm669, %v1009, 0.0
  %1134 = vadd.xlane.f32.xlu0 %v1133
  %v1135 = vpop.xlane.xlu0 %1134
  %v1136 = vsel %vm644, %v1010, 0.0
  %1137 = vadd.xlane.f32.xlu0 %v1136
  %v1138 = vpop.xlane.xlu0 %1137
  %v1139 = vsel %vm644, %v1011, 0.0
  %1140 = vadd.xlane.f32.xlu0 %v1139
  %v1141 = vpop.xlane.xlu0 %1140
  %v1142 = vsel %vm644, %v1012, 0.0
  %1143 = vadd.xlane.f32.xlu0 %v1142
  %v1144 = vpop.xlane.xlu0 %1143
  %v1145 = vsel %vm644, %v1013, 0.0
  %1146 = vadd.xlane.f32.xlu0 %v1145
  %v1147 = vpop.xlane.xlu0 %1146
  %v1148 = vsel %vm644, %v1014, 0.0
  %1149 = vadd.xlane.f32.xlu0 %v1148
  %v1150 = vpop.xlane.xlu0 %1149
  %v1151 = vsel %vm644, %v1015, 0.0
  %1152 = vadd.xlane.f32.xlu0 %v1151
  %v1153 = vpop.xlane.xlu0 %1152
  %v1154 = vsel %vm644, %v1016, 0.0
  %1155 = vadd.xlane.f32.xlu0 %v1154
  %v1156 = vpop.xlane.xlu0 %1155
  %v1157 = vsel %vm644, %v1017, 0.0
  %1158 = vadd.xlane.f32.xlu0 %v1157
  %v1159 = vpop.xlane.xlu0 %1158
  %v1160 = vsel %vm669, %v1018, 0.0
  %1161 = vadd.xlane.f32.xlu0 %v1160
  %v1162 = vpop.xlane.xlu0 %1161
  %v1163 = vsel %vm644, %v1019, 0.0
  %1164 = vadd.xlane.f32.xlu0 %v1163
  %v1165 = vpop.xlane.xlu0 %1164
  %v1166 = vsel %vm644, %v1020, 0.0
  %1167 = vadd.xlane.f32.xlu0 %v1166
  %v1168 = vpop.xlane.xlu0 %1167
  %v1169 = vsel %vm644, %v1021, 0.0
  %1170 = vadd.xlane.f32.xlu0 %v1169
  %v1171 = vpop.xlane.xlu0 %1170
  %v1172 = vsel %vm644, %v1022, 0.0
  %1173 = vadd.xlane.f32.xlu0 %v1172
  %v1174 = vpop.xlane.xlu0 %1173
  %v1175 = vsel %vm644, %v1023, 0.0
  %1176 = vadd.xlane.f32.xlu0 %v1175
  %v1177 = vpop.xlane.xlu0 %1176
  %v1178 = vsel %vm644, %v1024, 0.0
  %1179 = vadd.xlane.f32.xlu0 %v1178
  %v1180 = vpop.xlane.xlu0 %1179
  %v1181 = vsel %vm644, %v1025, 0.0
  %1182 = vadd.xlane.f32.xlu0 %v1181
  %v1183 = vpop.xlane.xlu0 %1182
  %v1184 = vsel %vm644, %v1026, 0.0
  %1185 = vadd.xlane.f32.xlu0 %v1184
  %v1186 = vpop.xlane.xlu0 %1185
  %v1187 = vsel %vm669, %v1027, 0.0
  %1188 = vadd.xlane.f32.xlu0 %v1187
  %v1189 = vpop.xlane.xlu0 %1188
  %v1190 = vsel %vm644, %v1028, 0.0
  %1191 = vadd.xlane.f32.xlu0 %v1190
  %v1192 = vpop.xlane.xlu0 %1191
  %v1193 = vsel %vm644, %v1029, 0.0
  %1194 = vadd.xlane.f32.xlu0 %v1193
  %v1195 = vpop.xlane.xlu0 %1194
  %v1196 = vsel %vm644, %v1030, 0.0
  %1197 = vadd.xlane.f32.xlu0 %v1196
  %v1198 = vpop.xlane.xlu0 %1197
  %v1199 = vsel %vm644, %v1031, 0.0
  %1200 = vadd.xlane.f32.xlu0 %v1199
  %v1201 = vpop.xlane.xlu0 %1200
  %v1202 = vsel %vm644, %v1032, 0.0
  %1203 = vadd.xlane.f32.xlu0 %v1202
  %v1204 = vpop.xlane.xlu0 %1203
  %v1205 = vsel %vm644, %v1033, 0.0
  %1206 = vadd.xlane.f32.xlu0 %v1205
  %v1207 = vpop.xlane.xlu0 %1206
  %v1208 = vsel %vm644, %v1034, 0.0
  %1209 = vadd.xlane.f32.xlu0 %v1208
  %v1210 = vpop.xlane.xlu0 %1209
  %v1211 = vsel %vm644, %v1035, 0.0
  %1212 = vadd.xlane.f32.xlu0 %v1211
  %v1213 = vpop.xlane.xlu0 %1212
  %v1214 = vsel %vm669, %v1036, 0.0
  %1215 = vadd.xlane.f32.xlu0 %v1214
  %v1216 = vpop.xlane.xlu0 %1215
  %v1217 = vsel %vm644, %v1037, 0.0
  %1218 = vadd.xlane.f32.xlu0 %v1217
  %v1219 = vpop.xlane.xlu0 %1218
  %v1220 = vsel %vm644, %v1038, 0.0
  %1221 = vadd.xlane.f32.xlu0 %v1220
  %v1222 = vpop.xlane.xlu0 %1221
  %v1223 = vsel %vm644, %v1039, 0.0
  %1224 = vadd.xlane.f32.xlu0 %v1223
  %v1225 = vpop.xlane.xlu0 %1224
  %v1226 = vsel %vm644, %v1040, 0.0
  %1227 = vadd.xlane.f32.xlu0 %v1226
  %v1228 = vpop.xlane.xlu0 %1227
  %v1229 = vsel %vm644, %v1041, 0.0
  %1230 = vadd.xlane.f32.xlu0 %v1229
  %v1231 = vpop.xlane.xlu0 %1230
  %v1232 = vsel %vm644, %v1042, 0.0
  %1233 = vadd.xlane.f32.xlu0 %v1232
  %v1234 = vpop.xlane.xlu0 %1233
  %v1235 = vsel %vm644, %v1043, 0.0
  %1236 = vadd.xlane.f32.xlu0 %v1235
  %v1237 = vpop.xlane.xlu0 %1236
  %v1238 = vsel %vm644, %v1044, 0.0
  %1239 = vadd.xlane.f32.xlu0 %v1238
  %v1240 = vpop.xlane.xlu0 %1239
  %v1241 = vsel %vm669, %v1045, 0.0
  %1242 = vadd.xlane.f32.xlu0 %v1241
  %v1243 = vpop.xlane.xlu0 %1242
  %v1244 = vsel %vm644, %v1046, 0.0
  %1245 = vadd.xlane.f32.xlu0 %v1244
  %v1246 = vpop.xlane.xlu0 %1245
  %v1247 = vsel %vm644, %v1047, 0.0
  %1248 = vadd.xlane.f32.xlu0 %v1247
  %v1249 = vpop.xlane.xlu0 %1248
  %v1250 = vsel %vm644, %v1048, 0.0
  %1251 = vadd.xlane.f32.xlu0 %v1250
  %v1252 = vpop.xlane.xlu0 %1251
  %v1253 = vsel %vm644, %v1049, 0.0
  %1254 = vadd.xlane.f32.xlu0 %v1253
  %v1255 = vpop.xlane.xlu0 %1254
  %v1256 = vsel %vm644, %v1050, 0.0
  %1257 = vadd.xlane.f32.xlu0 %v1256
  %v1258 = vpop.xlane.xlu0 %1257
  %v1259 = vsel %vm644, %v1051, 0.0
  %1260 = vadd.xlane.f32.xlu0 %v1259
  %v1261 = vpop.xlane.xlu0 %1260
  %v1262 = vsel %vm644, %v1052, 0.0
  %1263 = vadd.xlane.f32.xlu0 %v1262
  %v1264 = vpop.xlane.xlu0 %1263
  %v1265 = vsel %vm644, %v1053, 0.0
  %1266 = vadd.xlane.f32.xlu0 %v1265
  %v1267 = vpop.xlane.xlu0 %1266
  %v1268 = vsel %vm669, %v1054, 0.0
  %1269 = vadd.xlane.f32.xlu0 %v1268
  %v1270 = vpop.xlane.xlu0 %1269
  %v1271 = vadd.f32 %v1057, %v1060
  %v1272 = vadd.f32 %v1271, %v1063
  %v1273 = vadd.f32 %v1272, %v1066
  %v1274 = vadd.f32 %v1273, %v1069
  %v1275 = vadd.f32 %v1274, %v1072
  %v1276 = vadd.f32 %v1275, %v1075
  %v1277 = vadd.f32 %v1276, %v1078
  %v1278 = vsel %vm869, %v1081, 0.0
  %v1279 = vadd.f32 %v1277, %v1278
  %v1280 = vrot.slane %v1279, 4
  %v1281 = vadd.f32 %v1279, %v1280
  %v1282 = vrot.slane %v1281, 2
  %v1283 = vadd.f32 %v1281, %v1282
  %v1284 = vrot.slane %v1283, 1
  %v1285 = vadd.f32 %v1283, %v1284
  %v1286 = vadd.f32 %v1084, %v1087
  %v1287 = vadd.f32 %v1286, %v1090
  %v1288 = vadd.f32 %v1287, %v1093
  %v1289 = vadd.f32 %v1288, %v1096
  %v1290 = vadd.f32 %v1289, %v1099
  %v1291 = vadd.f32 %v1290, %v1102
  %v1292 = vadd.f32 %v1291, %v1105
  %v1293 = vsel %vm869, %v1108, 0.0
  %v1294 = vadd.f32 %v1292, %v1293
  %v1295 = vrot.slane %v1294, 4
  %v1296 = vadd.f32 %v1294, %v1295
  %v1297 = vrot.slane %v1296, 2
  %v1298 = vadd.f32 %v1296, %v1297
  %v1299 = vrot.slane %v1298, 1
  %v1300 = vadd.f32 %v1298, %v1299
  %v1301 = vadd.f32 %v1111, %v1114
  %v1302 = vadd.f32 %v1301, %v1117
  %v1303 = vadd.f32 %v1302, %v1120
  %v1304 = vadd.f32 %v1303, %v1123
  %v1305 = vadd.f32 %v1304, %v1126
  %v1306 = vadd.f32 %v1305, %v1129
  %v1307 = vadd.f32 %v1306, %v1132
  %v1308 = vsel %vm869, %v1135, 0.0
  %v1309 = vadd.f32 %v1307, %v1308
  %v1310 = vrot.slane %v1309, 4
  %v1311 = vadd.f32 %v1309, %v1310
  %v1312 = vrot.slane %v1311, 2
  %v1313 = vadd.f32 %v1311, %v1312
  %v1314 = vrot.slane %v1313, 1
  %v1315 = vadd.f32 %v1313, %v1314
  %v1316 = vadd.f32 %v1138, %v1141
  %v1317 = vadd.f32 %v1316, %v1144
  %v1318 = vadd.f32 %v1317, %v1147
  %v1319 = vadd.f32 %v1318, %v1150
  %v1320 = vadd.f32 %v1319, %v1153
  %v1321 = vadd.f32 %v1320, %v1156
  %v1322 = vadd.f32 %v1321, %v1159
  %v1323 = vsel %vm869, %v1162, 0.0
  %v1324 = vadd.f32 %v1322, %v1323
  %v1325 = vrot.slane %v1324, 4
  %v1326 = vadd.f32 %v1324, %v1325
  %v1327 = vrot.slane %v1326, 2
  %v1328 = vadd.f32 %v1326, %v1327
  %v1329 = vrot.slane %v1328, 1
  %v1330 = vadd.f32 %v1328, %v1329
  %v1331 = vadd.f32 %v1165, %v1168
  %v1332 = vadd.f32 %v1331, %v1171
  %v1333 = vadd.f32 %v1332, %v1174
  %v1334 = vadd.f32 %v1333, %v1177
  %v1335 = vadd.f32 %v1334, %v1180
  %v1336 = vadd.f32 %v1335, %v1183
  %v1337 = vadd.f32 %v1336, %v1186
  %v1338 = vsel %vm869, %v1189, 0.0
  %v1339 = vadd.f32 %v1337, %v1338
  %v1340 = vrot.slane %v1339, 4
  %v1341 = vadd.f32 %v1339, %v1340
  %v1342 = vrot.slane %v1341, 2
  %v1343 = vadd.f32 %v1341, %v1342
  %v1344 = vrot.slane %v1343, 1
  %v1345 = vadd.f32 %v1343, %v1344
  %v1346 = vadd.f32 %v1192, %v1195
  %v1347 = vadd.f32 %v1346, %v1198
  %v1348 = vadd.f32 %v1347, %v1201
  %v1349 = vadd.f32 %v1348, %v1204
  %v1350 = vadd.f32 %v1349, %v1207
  %v1351 = vadd.f32 %v1350, %v1210
  %v1352 = vadd.f32 %v1351, %v1213
  %v1353 = vsel %vm869, %v1216, 0.0
  %v1354 = vadd.f32 %v1352, %v1353
  %v1355 = vrot.slane %v1354, 4
  %v1356 = vadd.f32 %v1354, %v1355
  %v1357 = vrot.slane %v1356, 2
  %v1358 = vadd.f32 %v1356, %v1357
  %v1359 = vrot.slane %v1358, 1
  %v1360 = vadd.f32 %v1358, %v1359
  %v1361 = vadd.f32 %v1219, %v1222
  %v1362 = vadd.f32 %v1361, %v1225
  %v1363 = vadd.f32 %v1362, %v1228
  %v1364 = vadd.f32 %v1363, %v1231
  %v1365 = vadd.f32 %v1364, %v1234
  %v1366 = vadd.f32 %v1365, %v1237
  %v1367 = vadd.f32 %v1366, %v1240
  %v1368 = vsel %vm869, %v1243, 0.0
  %v1369 = vadd.f32 %v1367, %v1368
  %v1370 = vrot.slane %v1369, 4
  %v1371 = vadd.f32 %v1369, %v1370
  %v1372 = vrot.slane %v1371, 2
  %v1373 = vadd.f32 %v1371, %v1372
  %v1374 = vrot.slane %v1373, 1
  %v1375 = vadd.f32 %v1373, %v1374
  %v1376 = vadd.f32 %v1246, %v1249
  %v1377 = vadd.f32 %v1376, %v1252
  %v1378 = vadd.f32 %v1377, %v1255
  %v1379 = vadd.f32 %v1378, %v1258
  %v1380 = vadd.f32 %v1379, %v1261
  %v1381 = vadd.f32 %v1380, %v1264
  %v1382 = vadd.f32 %v1381, %v1267
  %v1383 = vsel %vm869, %v1270, 0.0
  %v1384 = vadd.f32 %v1382, %v1383
  %v1385 = vrot.slane %v1384, 4
  %v1386 = vadd.f32 %v1384, %v1385
  %v1387 = vrot.slane %v1386, 2
  %v1388 = vadd.f32 %v1386, %v1387
  %v1389 = vrot.slane %v1388, 1
  %v1390 = vadd.f32 %v1388, %v1389
  %v1391 = vmul.f32 %v877, 0.00022956841
  %v1392 = vmul.f32 %v892, 0.00022956841
  %v1393 = vmul.f32 %v907, 0.00022956841
  %v1394 = vmul.f32 %v922, 0.00022956841
  %v1395 = vmul.f32 %v937, 0.00022956841
  %v1396 = vmul.f32 %v952, 0.00022956841
  %v1397 = vmul.f32 %v967, 0.00022956841
  %v1398 = vmul.f32 %v982, 0.00022956841
  %v1399 = vmul.f32 %v1285, 0.00022956841
  %v1400 = vmul.f32 %v1300, 0.00022956841
  %v1401 = vmul.f32 %v1315, 0.00022956841
  %v1402 = vmul.f32 %v1330, 0.00022956841
  %v1403 = vmul.f32 %v1345, 0.00022956841
  %v1404 = vmul.f32 %v1360, 0.00022956841
  %v1405 = vmul.f32 %v1375, 0.00022956841
  %v1406 = vmul.f32 %v1390, 0.00022956841
  %v1407 = vmul.f32 %v1391, %v1391
  %v1408 = vmul.f32 %v1392, %v1392
  %v1409 = vmul.f32 %v1393, %v1393
  %v1410 = vmul.f32 %v1394, %v1394
  %v1411 = vmul.f32 %v1395, %v1395
  %v1412 = vmul.f32 %v1396, %v1396
  %v1413 = vmul.f32 %v1397, %v1397
  %v1414 = vmul.f32 %v1398, %v1398
  %v1415 = vsub.f32 %v1399, %v1407
  %v1416 = vsub.f32 %v1400, %v1408
  %v1417 = vsub.f32 %v1401, %v1409
  %v1418 = vsub.f32 %v1402, %v1410
  %v1419 = vsub.f32 %v1403, %v1411
  %v1420 = vsub.f32 %v1404, %v1412
  %v1421 = vsub.f32 %v1405, %v1413
  %v1422 = vsub.f32 %v1406, %v1414
  %v1423 = vmax.f32 %v1415, 0.0
  %v1424 = vmax.f32 %v1416, 0.0
  %v1425 = vmax.f32 %v1417, 0.0
  %v1426 = vmax.f32 %v1418, 0.0
  %v1427 = vmax.f32 %v1419, 0.0
  %v1428 = vmax.f32 %v1420, 0.0
  %v1429 = vmax.f32 %v1421, 0.0
  %v1430 = vmax.f32 %v1422, 0.0
  %v1431 = vld [vmem:[%s2] sm:$0x1]
  %v1432 = vld [vmem:[%s2 + $0x1] sm:$0x1]
  %v1433 = vld [vmem:[%s2 + $0x2] sm:$0x1]
  %v1434 = vld [vmem:[%s2 + $0x3] sm:$0x1]
  %v1435 = vld [vmem:[%s2 + $0x4] sm:$0x1]
  %v1436 = vld [vmem:[%s2 + $0x5] sm:$0x1]
  %v1437 = vld [vmem:[%s2 + $0x6] sm:$0x1]
  %v1438 = vld [vmem:[%s2 + $0x7] sm:$0x1]
  %v1439 = vadd.f32 %v1423, 1e-05
  %v1440 = vadd.f32 %v1424, 1e-05
  %v1441 = vadd.f32 %v1425, 1e-05
  %v1442 = vadd.f32 %v1426, 1e-05
  %v1443 = vadd.f32 %v1427, 1e-05
  %v1444 = vadd.f32 %v1428, 1e-05
  %v1445 = vadd.f32 %v1429, 1e-05
  %v1446 = vadd.f32 %v1430, 1e-05
  %v1447 = vrsqrt.pop %v1439
  %v1448 = vrsqrt.pop %v1440
  %v1449 = vrsqrt.pop %v1441
  %v1450 = vrsqrt.pop %v1442
  %v1451 = vrsqrt.pop %v1443
  %v1452 = vrsqrt.pop %v1444
  %v1453 = vrsqrt.pop %v1445
  %v1454 = vrsqrt.pop %v1446
  %v1455 = vmul.f32 %v1431, %v1447
  %v1456 = vmul.f32 %v1432, %v1448
  %v1457 = vmul.f32 %v1433, %v1449
  %v1458 = vmul.f32 %v1434, %v1450
  %v1459 = vmul.f32 %v1435, %v1451
  %v1460 = vmul.f32 %v1436, %v1452
  %v1461 = vmul.f32 %v1437, %v1453
  %v1462 = vmul.f32 %v1438, %v1454
  %v1463 = vld [vmem:[%s3] sm:$0x1]
  %v1464 = vld [vmem:[%s3 + $0x1] sm:$0x1]
  %v1465 = vld [vmem:[%s3 + $0x2] sm:$0x1]
  %v1466 = vld [vmem:[%s3 + $0x3] sm:$0x1]
  %v1467 = vld [vmem:[%s3 + $0x4] sm:$0x1]
  %v1468 = vld [vmem:[%s3 + $0x5] sm:$0x1]
  %v1469 = vld [vmem:[%s3 + $0x6] sm:$0x1]
  %v1470 = vld [vmem:[%s3 + $0x7] sm:$0x1]
  %v1471 = vmul.f32 %v1391, %v1455
  %v1472 = vmul.f32 %v1392, %v1456
  %v1473 = vmul.f32 %v1393, %v1457
  %v1474 = vmul.f32 %v1394, %v1458
  %v1475 = vmul.f32 %v1395, %v1459
  %v1476 = vmul.f32 %v1396, %v1460
  %v1477 = vmul.f32 %v1397, %v1461
  %v1478 = vmul.f32 %v1398, %v1462
  %v1479 = vsub.f32 %v1463, %v1471
  %v1480 = vsub.f32 %v1464, %v1472
  %v1481 = vsub.f32 %v1465, %v1473
  %v1482 = vsub.f32 %v1466, %v1474
  %v1483 = vsub.f32 %v1467, %v1475
  %v1484 = vsub.f32 %v1468, %v1476
  %v1485 = vsub.f32 %v1469, %v1477
  %v1486 = vsub.f32 %v1470, %v1478
  %v1495 = vlaneseq
  %v1496 = vshrl.u32 %v1495, 7
  %v1497 = vsub.s32 0, %v1496
  %v1498 = vrot.slane %v1455, %v1497
  %v1499 = vlaneseq
  %v1500 = vshrl.u32 %v1499, 7
  %v1501 = vsub.s32 0, %v1500
  %v1502 = vrot.slane %v1456, %v1501
  %v1503 = vlaneseq
  %v1504 = vshrl.u32 %v1503, 7
  %v1505 = vsub.s32 0, %v1504
  %v1506 = vrot.slane %v1457, %v1505
  %v1507 = vlaneseq
  %v1508 = vshrl.u32 %v1507, 7
  %v1509 = vsub.s32 0, %v1508
  %v1510 = vrot.slane %v1458, %v1509
  %v1511 = vlaneseq
  %v1512 = vshrl.u32 %v1511, 7
  %v1513 = vsub.s32 0, %v1512
  %v1514 = vrot.slane %v1459, %v1513
  %v1515 = vlaneseq
  %v1516 = vshrl.u32 %v1515, 7
  %v1517 = vsub.s32 0, %v1516
  %v1518 = vrot.slane %v1460, %v1517
  %v1519 = vlaneseq
  %v1520 = vshrl.u32 %v1519, 7
  %v1521 = vsub.s32 0, %v1520
  %v1522 = vrot.slane %v1461, %v1521
  %v1523 = vlaneseq
  %v1524 = vshrl.u32 %v1523, 7
  %v1525 = vsub.s32 0, %v1524
  %v1526 = vrot.slane %v1462, %v1525
  %1527 = vset.pattern.permute.xlu0 0
  %1528 = vperm.xlu0 %1527, %v1498
  %v1529 = vpop.permute.xlu0 %1528
  %1531 = vset.pattern.permute.xlu0 0
  %1532 = vperm.xlu0 %1531, %v1502
  %v1533 = vpop.permute.xlu0 %1532
  %1535 = vset.pattern.permute.xlu0 0
  %1536 = vperm.xlu0 %1535, %v1506
  %v1537 = vpop.permute.xlu0 %1536
  %1539 = vset.pattern.permute.xlu0 0
  %1540 = vperm.xlu0 %1539, %v1510
  %v1541 = vpop.permute.xlu0 %1540
  %1543 = vset.pattern.permute.xlu0 0
  %1544 = vperm.xlu0 %1543, %v1514
  %v1545 = vpop.permute.xlu0 %1544
  %1547 = vset.pattern.permute.xlu0 0
  %1548 = vperm.xlu0 %1547, %v1518
  %v1549 = vpop.permute.xlu0 %1548
  %1551 = vset.pattern.permute.xlu0 0
  %1552 = vperm.xlu0 %1551, %v1522
  %v1553 = vpop.permute.xlu0 %1552
  %1555 = vset.pattern.permute.xlu0 0
  %1556 = vperm.xlu0 %1555, %v1526
  %v1557 = vpop.permute.xlu0 %1556
  %v1559 = vmul.f32 %v572, %v1529
  %v1560 = vmul.f32 %v573, %v1529
  %v1561 = vmul.f32 %v574, %v1529
  %v1562 = vmul.f32 %v575, %v1529
  %v1563 = vmul.f32 %v576, %v1529
  %v1564 = vmul.f32 %v577, %v1529
  %v1565 = vmul.f32 %v578, %v1529
  %v1566 = vmul.f32 %v579, %v1529
  %v1567 = vmul.f32 %v580, %v1529
  %v1568 = vmul.f32 %v581, %v1533
  %v1569 = vmul.f32 %v582, %v1533
  %v1570 = vmul.f32 %v583, %v1533
  %v1571 = vmul.f32 %v584, %v1533
  %v1572 = vmul.f32 %v585, %v1533
  %v1573 = vmul.f32 %v586, %v1533
  %v1574 = vmul.f32 %v587, %v1533
  %v1575 = vmul.f32 %v588, %v1533
  %v1576 = vmul.f32 %v589, %v1533
  %v1577 = vmul.f32 %v590, %v1537
  %v1578 = vmul.f32 %v591, %v1537
  %v1579 = vmul.f32 %v592, %v1537
  %v1580 = vmul.f32 %v593, %v1537
  %v1581 = vmul.f32 %v594, %v1537
  %v1582 = vmul.f32 %v595, %v1537
  %v1583 = vmul.f32 %v596, %v1537
  %v1584 = vmul.f32 %v597, %v1537
  %v1585 = vmul.f32 %v598, %v1537
  %v1586 = vmul.f32 %v599, %v1541
  %v1587 = vmul.f32 %v600, %v1541
  %v1588 = vmul.f32 %v601, %v1541
  %v1589 = vmul.f32 %v602, %v1541
  %v1590 = vmul.f32 %v603, %v1541
  %v1591 = vmul.f32 %v604, %v1541
  %v1592 = vmul.f32 %v605, %v1541
  %v1593 = vmul.f32 %v606, %v1541
  %v1594 = vmul.f32 %v607, %v1541
  %v1595 = vmul.f32 %v608, %v1545
  %v1596 = vmul.f32 %v609, %v1545
  %v1597 = vmul.f32 %v610, %v1545
  %v1598 = vmul.f32 %v611, %v1545
  %v1599 = vmul.f32 %v612, %v1545
  %v1600 = vmul.f32 %v613, %v1545
  %v1601 = vmul.f32 %v614, %v1545
  %v1602 = vmul.f32 %v615, %v1545
  %v1603 = vmul.f32 %v616, %v1545
  %v1604 = vmul.f32 %v617, %v1549
  %v1605 = vmul.f32 %v618, %v1549
  %v1606 = vmul.f32 %v619, %v1549
  %v1607 = vmul.f32 %v620, %v1549
  %v1608 = vmul.f32 %v621, %v1549
  %v1609 = vmul.f32 %v622, %v1549
  %v1610 = vmul.f32 %v623, %v1549
  %v1611 = vmul.f32 %v624, %v1549
  %v1612 = vmul.f32 %v625, %v1549
  %v1613 = vmul.f32 %v626, %v1553
  %v1614 = vmul.f32 %v627, %v1553
  %v1615 = vmul.f32 %v628, %v1553
  %v1616 = vmul.f32 %v629, %v1553
  %v1617 = vmul.f32 %v630, %v1553
  %v1618 = vmul.f32 %v631, %v1553
  %v1619 = vmul.f32 %v632, %v1553
  %v1620 = vmul.f32 %v633, %v1553
  %v1621 = vmul.f32 %v634, %v1553
  %v1622 = vmul.f32 %v635, %v1557
  %v1623 = vmul.f32 %v636, %v1557
  %v1624 = vmul.f32 %v637, %v1557
  %v1625 = vmul.f32 %v638, %v1557
  %v1626 = vmul.f32 %v639, %v1557
  %v1627 = vmul.f32 %v640, %v1557
  %v1628 = vmul.f32 %v641, %v1557
  %v1629 = vmul.f32 %v642, %v1557
  %v1630 = vmul.f32 %v643, %v1557
  %v1639 = vlaneseq
  %v1640 = vshrl.u32 %v1639, 7
  %v1641 = vsub.s32 0, %v1640
  %v1642 = vrot.slane %v1479, %v1641
  %v1643 = vlaneseq
  %v1644 = vshrl.u32 %v1643, 7
  %v1645 = vsub.s32 0, %v1644
  %v1646 = vrot.slane %v1480, %v1645
  %v1647 = vlaneseq
  %v1648 = vshrl.u32 %v1647, 7
  %v1649 = vsub.s32 0, %v1648
  %v1650 = vrot.slane %v1481, %v1649
  %v1651 = vlaneseq
  %v1652 = vshrl.u32 %v1651, 7
  %v1653 = vsub.s32 0, %v1652
  %v1654 = vrot.slane %v1482, %v1653
  %v1655 = vlaneseq
  %v1656 = vshrl.u32 %v1655, 7
  %v1657 = vsub.s32 0, %v1656
  %v1658 = vrot.slane %v1483, %v1657
  %v1659 = vlaneseq
  %v1660 = vshrl.u32 %v1659, 7
  %v1661 = vsub.s32 0, %v1660
  %v1662 = vrot.slane %v1484, %v1661
  %v1663 = vlaneseq
  %v1664 = vshrl.u32 %v1663, 7
  %v1665 = vsub.s32 0, %v1664
  %v1666 = vrot.slane %v1485, %v1665
  %v1667 = vlaneseq
  %v1668 = vshrl.u32 %v1667, 7
  %v1669 = vsub.s32 0, %v1668
  %v1670 = vrot.slane %v1486, %v1669
  %1671 = vset.pattern.permute.xlu0 0
  %1672 = vperm.xlu0 %1671, %v1642
  %v1673 = vpop.permute.xlu0 %1672
  %1675 = vset.pattern.permute.xlu0 0
  %1676 = vperm.xlu0 %1675, %v1646
  %v1677 = vpop.permute.xlu0 %1676
  %1679 = vset.pattern.permute.xlu0 0
  %1680 = vperm.xlu0 %1679, %v1650
  %v1681 = vpop.permute.xlu0 %1680
  %1683 = vset.pattern.permute.xlu0 0
  %1684 = vperm.xlu0 %1683, %v1654
  %v1685 = vpop.permute.xlu0 %1684
  %1687 = vset.pattern.permute.xlu0 0
  %1688 = vperm.xlu0 %1687, %v1658
  %v1689 = vpop.permute.xlu0 %1688
  %1691 = vset.pattern.permute.xlu0 0
  %1692 = vperm.xlu0 %1691, %v1662
  %v1693 = vpop.permute.xlu0 %1692
  %1695 = vset.pattern.permute.xlu0 0
  %1696 = vperm.xlu0 %1695, %v1666
  %v1697 = vpop.permute.xlu0 %1696
  %1699 = vset.pattern.permute.xlu0 0
  %1700 = vperm.xlu0 %1699, %v1670
  %v1701 = vpop.permute.xlu0 %1700
  %v1703 = vadd.f32 %v1559, %v1673
  %v1704 = vadd.f32 %v1560, %v1673
  %v1705 = vadd.f32 %v1561, %v1673
  %v1706 = vadd.f32 %v1562, %v1673
  %v1707 = vadd.f32 %v1563, %v1673
  %v1708 = vadd.f32 %v1564, %v1673
  %v1709 = vadd.f32 %v1565, %v1673
  %v1710 = vadd.f32 %v1566, %v1673
  %v1711 = vadd.f32 %v1567, %v1673
  %v1712 = vadd.f32 %v1568, %v1677
  %v1713 = vadd.f32 %v1569, %v1677
  %v1714 = vadd.f32 %v1570, %v1677
  %v1715 = vadd.f32 %v1571, %v1677
  %v1716 = vadd.f32 %v1572, %v1677
  %v1717 = vadd.f32 %v1573, %v1677
  %v1718 = vadd.f32 %v1574, %v1677
  %v1719 = vadd.f32 %v1575, %v1677
  %v1720 = vadd.f32 %v1576, %v1677
  %v1721 = vadd.f32 %v1577, %v1681
  %v1722 = vadd.f32 %v1578, %v1681
  %v1723 = vadd.f32 %v1579, %v1681
  %v1724 = vadd.f32 %v1580, %v1681
  %v1725 = vadd.f32 %v1581, %v1681
  %v1726 = vadd.f32 %v1582, %v1681
  %v1727 = vadd.f32 %v1583, %v1681
  %v1728 = vadd.f32 %v1584, %v1681
  %v1729 = vadd.f32 %v1585, %v1681
  %v1730 = vadd.f32 %v1586, %v1685
  %v1731 = vadd.f32 %v1587, %v1685
  %v1732 = vadd.f32 %v1588, %v1685
  %v1733 = vadd.f32 %v1589, %v1685
  %v1734 = vadd.f32 %v1590, %v1685
  %v1735 = vadd.f32 %v1591, %v1685
  %v1736 = vadd.f32 %v1592, %v1685
  %v1737 = vadd.f32 %v1593, %v1685
  %v1738 = vadd.f32 %v1594, %v1685
  %v1739 = vadd.f32 %v1595, %v1689
  %v1740 = vadd.f32 %v1596, %v1689
  %v1741 = vadd.f32 %v1597, %v1689
  %v1742 = vadd.f32 %v1598, %v1689
  %v1743 = vadd.f32 %v1599, %v1689
  %v1744 = vadd.f32 %v1600, %v1689
  %v1745 = vadd.f32 %v1601, %v1689
  %v1746 = vadd.f32 %v1602, %v1689
  %v1747 = vadd.f32 %v1603, %v1689
  %v1748 = vadd.f32 %v1604, %v1693
  %v1749 = vadd.f32 %v1605, %v1693
  %v1750 = vadd.f32 %v1606, %v1693
  %v1751 = vadd.f32 %v1607, %v1693
  %v1752 = vadd.f32 %v1608, %v1693
  %v1753 = vadd.f32 %v1609, %v1693
  %v1754 = vadd.f32 %v1610, %v1693
  %v1755 = vadd.f32 %v1611, %v1693
  %v1756 = vadd.f32 %v1612, %v1693
  %v1757 = vadd.f32 %v1613, %v1697
  %v1758 = vadd.f32 %v1614, %v1697
  %v1759 = vadd.f32 %v1615, %v1697
  %v1760 = vadd.f32 %v1616, %v1697
  %v1761 = vadd.f32 %v1617, %v1697
  %v1762 = vadd.f32 %v1618, %v1697
  %v1763 = vadd.f32 %v1619, %v1697
  %v1764 = vadd.f32 %v1620, %v1697
  %v1765 = vadd.f32 %v1621, %v1697
  %v1766 = vadd.f32 %v1622, %v1701
  %v1767 = vadd.f32 %v1623, %v1701
  %v1768 = vadd.f32 %v1624, %v1701
  %v1769 = vadd.f32 %v1625, %v1701
  %v1770 = vadd.f32 %v1626, %v1701
  %v1771 = vadd.f32 %v1627, %v1701
  %v1772 = vadd.f32 %v1628, %v1701
  %v1773 = vadd.f32 %v1629, %v1701
  %v1774 = vadd.f32 %v1630, %v1701
  %v1775 = vmul.f32 %v1703, 0.5
  %v1776 = vmul.f32 %v1704, 0.5
  %v1777 = vmul.f32 %v1705, 0.5
  %v1778 = vmul.f32 %v1706, 0.5
  %v1779 = vmul.f32 %v1707, 0.5
  %v1780 = vmul.f32 %v1708, 0.5
  %v1781 = vmul.f32 %v1709, 0.5
  %v1782 = vmul.f32 %v1710, 0.5
  %v1783 = vmul.f32 %v1711, 0.5
  %v1784 = vmul.f32 %v1712, 0.5
  %v1785 = vmul.f32 %v1713, 0.5
  %v1786 = vmul.f32 %v1714, 0.5
  %v1787 = vmul.f32 %v1715, 0.5
  %v1788 = vmul.f32 %v1716, 0.5
  %v1789 = vmul.f32 %v1717, 0.5
  %v1790 = vmul.f32 %v1718, 0.5
  %v1791 = vmul.f32 %v1719, 0.5
  %v1792 = vmul.f32 %v1720, 0.5
  %v1793 = vmul.f32 %v1721, 0.5
  %v1794 = vmul.f32 %v1722, 0.5
  %v1795 = vmul.f32 %v1723, 0.5
  %v1796 = vmul.f32 %v1724, 0.5
  %v1797 = vmul.f32 %v1725, 0.5
  %v1798 = vmul.f32 %v1726, 0.5
  %v1799 = vmul.f32 %v1727, 0.5
  %v1800 = vmul.f32 %v1728, 0.5
  %v1801 = vmul.f32 %v1729, 0.5
  %v1802 = vmul.f32 %v1730, 0.5
  %v1803 = vmul.f32 %v1731, 0.5
  %v1804 = vmul.f32 %v1732, 0.5
  %v1805 = vmul.f32 %v1733, 0.5
  %v1806 = vmul.f32 %v1734, 0.5
  %v1807 = vmul.f32 %v1735, 0.5
  %v1808 = vmul.f32 %v1736, 0.5
  %v1809 = vmul.f32 %v1737, 0.5
  %v1810 = vmul.f32 %v1738, 0.5
  %v1811 = vmul.f32 %v1739, 0.5
  %v1812 = vmul.f32 %v1740, 0.5
  %v1813 = vmul.f32 %v1741, 0.5
  %v1814 = vmul.f32 %v1742, 0.5
  %v1815 = vmul.f32 %v1743, 0.5
  %v1816 = vmul.f32 %v1744, 0.5
  %v1817 = vmul.f32 %v1745, 0.5
  %v1818 = vmul.f32 %v1746, 0.5
  %v1819 = vmul.f32 %v1747, 0.5
  %v1820 = vmul.f32 %v1748, 0.5
  %v1821 = vmul.f32 %v1749, 0.5
  %v1822 = vmul.f32 %v1750, 0.5
  %v1823 = vmul.f32 %v1751, 0.5
  %v1824 = vmul.f32 %v1752, 0.5
  %v1825 = vmul.f32 %v1753, 0.5
  %v1826 = vmul.f32 %v1754, 0.5
  %v1827 = vmul.f32 %v1755, 0.5
  %v1828 = vmul.f32 %v1756, 0.5
  %v1829 = vmul.f32 %v1757, 0.5
  %v1830 = vmul.f32 %v1758, 0.5
  %v1831 = vmul.f32 %v1759, 0.5
  %v1832 = vmul.f32 %v1760, 0.5
  %v1833 = vmul.f32 %v1761, 0.5
  %v1834 = vmul.f32 %v1762, 0.5
  %v1835 = vmul.f32 %v1763, 0.5
  %v1836 = vmul.f32 %v1764, 0.5
  %v1837 = vmul.f32 %v1765, 0.5
  %v1838 = vmul.f32 %v1766, 0.5
  %v1839 = vmul.f32 %v1767, 0.5
  %v1840 = vmul.f32 %v1768, 0.5
  %v1841 = vmul.f32 %v1769, 0.5
  %v1842 = vmul.f32 %v1770, 0.5
  %v1843 = vmul.f32 %v1771, 0.5
  %v1844 = vmul.f32 %v1772, 0.5
  %v1845 = vmul.f32 %v1773, 0.5
  %v1846 = vmul.f32 %v1774, 0.5
  %v1847 = vtanh.pop %v1775
  %v1848 = vtanh.pop %v1776
  %v1849 = vtanh.pop %v1777
  %v1850 = vtanh.pop %v1778
  %v1851 = vtanh.pop %v1779
  %v1852 = vtanh.pop %v1780
  %v1853 = vtanh.pop %v1781
  %v1854 = vtanh.pop %v1782
  %v1855 = vtanh.pop %v1783
  %v1856 = vtanh.pop %v1784
  %v1857 = vtanh.pop %v1785
  %v1858 = vtanh.pop %v1786
  %v1859 = vtanh.pop %v1787
  %v1860 = vtanh.pop %v1788
  %v1861 = vtanh.pop %v1789
  %v1862 = vtanh.pop %v1790
  %v1863 = vtanh.pop %v1791
  %v1864 = vtanh.pop %v1792
  %v1865 = vtanh.pop %v1793
  %v1866 = vtanh.pop %v1794
  %v1867 = vtanh.pop %v1795
  %v1868 = vtanh.pop %v1796
  %v1869 = vtanh.pop %v1797
  %v1870 = vtanh.pop %v1798
  %v1871 = vtanh.pop %v1799
  %v1872 = vtanh.pop %v1800
  %v1873 = vtanh.pop %v1801
  %v1874 = vtanh.pop %v1802
  %v1875 = vtanh.pop %v1803
  %v1876 = vtanh.pop %v1804
  %v1877 = vtanh.pop %v1805
  %v1878 = vtanh.pop %v1806
  %v1879 = vtanh.pop %v1807
  %v1880 = vtanh.pop %v1808
  %v1881 = vtanh.pop %v1809
  %v1882 = vtanh.pop %v1810
  %v1883 = vtanh.pop %v1811
  %v1884 = vtanh.pop %v1812
  %v1885 = vtanh.pop %v1813
  %v1886 = vtanh.pop %v1814
  %v1887 = vtanh.pop %v1815
  %v1888 = vtanh.pop %v1816
  %v1889 = vtanh.pop %v1817
  %v1890 = vtanh.pop %v1818
  %v1891 = vtanh.pop %v1819
  %v1892 = vtanh.pop %v1820
  %v1893 = vtanh.pop %v1821
  %v1894 = vtanh.pop %v1822
  %v1895 = vtanh.pop %v1823
  %v1896 = vtanh.pop %v1824
  %v1897 = vtanh.pop %v1825
  %v1898 = vtanh.pop %v1826
  %v1899 = vtanh.pop %v1827
  %v1900 = vtanh.pop %v1828
  %v1901 = vtanh.pop %v1829
  %v1902 = vtanh.pop %v1830
  %v1903 = vtanh.pop %v1831
  %v1904 = vtanh.pop %v1832
  %v1905 = vtanh.pop %v1833
  %v1906 = vtanh.pop %v1834
  %v1907 = vtanh.pop %v1835
  %v1908 = vtanh.pop %v1836
  %v1909 = vtanh.pop %v1837
  %v1910 = vtanh.pop %v1838
  %v1911 = vtanh.pop %v1839
  %v1912 = vtanh.pop %v1840
  %v1913 = vtanh.pop %v1841
  %v1914 = vtanh.pop %v1842
  %v1915 = vtanh.pop %v1843
  %v1916 = vtanh.pop %v1844
  %v1917 = vtanh.pop %v1845
  %v1918 = vtanh.pop %v1846
  %v1919 = vadd.f32 %v1847, 1.0
  %v1920 = vadd.f32 %v1848, 1.0
  %v1921 = vadd.f32 %v1849, 1.0
  %v1922 = vadd.f32 %v1850, 1.0
  %v1923 = vadd.f32 %v1851, 1.0
  %v1924 = vadd.f32 %v1852, 1.0
  %v1925 = vadd.f32 %v1853, 1.0
  %v1926 = vadd.f32 %v1854, 1.0
  %v1927 = vadd.f32 %v1855, 1.0
  %v1928 = vadd.f32 %v1856, 1.0
  %v1929 = vadd.f32 %v1857, 1.0
  %v1930 = vadd.f32 %v1858, 1.0
  %v1931 = vadd.f32 %v1859, 1.0
  %v1932 = vadd.f32 %v1860, 1.0
  %v1933 = vadd.f32 %v1861, 1.0
  %v1934 = vadd.f32 %v1862, 1.0
  %v1935 = vadd.f32 %v1863, 1.0
  %v1936 = vadd.f32 %v1864, 1.0
  %v1937 = vadd.f32 %v1865, 1.0
  %v1938 = vadd.f32 %v1866, 1.0
  %v1939 = vadd.f32 %v1867, 1.0
  %v1940 = vadd.f32 %v1868, 1.0
  %v1941 = vadd.f32 %v1869, 1.0
  %v1942 = vadd.f32 %v1870, 1.0
  %v1943 = vadd.f32 %v1871, 1.0
  %v1944 = vadd.f32 %v1872, 1.0
  %v1945 = vadd.f32 %v1873, 1.0
  %v1946 = vadd.f32 %v1874, 1.0
  %v1947 = vadd.f32 %v1875, 1.0
  %v1948 = vadd.f32 %v1876, 1.0
  %v1949 = vadd.f32 %v1877, 1.0
  %v1950 = vadd.f32 %v1878, 1.0
  %v1951 = vadd.f32 %v1879, 1.0
  %v1952 = vadd.f32 %v1880, 1.0
  %v1953 = vadd.f32 %v1881, 1.0
  %v1954 = vadd.f32 %v1882, 1.0
  %v1955 = vadd.f32 %v1883, 1.0
  %v1956 = vadd.f32 %v1884, 1.0
  %v1957 = vadd.f32 %v1885, 1.0
  %v1958 = vadd.f32 %v1886, 1.0
  %v1959 = vadd.f32 %v1887, 1.0
  %v1960 = vadd.f32 %v1888, 1.0
  %v1961 = vadd.f32 %v1889, 1.0
  %v1962 = vadd.f32 %v1890, 1.0
  %v1963 = vadd.f32 %v1891, 1.0
  %v1964 = vadd.f32 %v1892, 1.0
  %v1965 = vadd.f32 %v1893, 1.0
  %v1966 = vadd.f32 %v1894, 1.0
  %v1967 = vadd.f32 %v1895, 1.0
  %v1968 = vadd.f32 %v1896, 1.0
  %v1969 = vadd.f32 %v1897, 1.0
  %v1970 = vadd.f32 %v1898, 1.0
  %v1971 = vadd.f32 %v1899, 1.0
  %v1972 = vadd.f32 %v1900, 1.0
  %v1973 = vadd.f32 %v1901, 1.0
  %v1974 = vadd.f32 %v1902, 1.0
  %v1975 = vadd.f32 %v1903, 1.0
  %v1976 = vadd.f32 %v1904, 1.0
  %v1977 = vadd.f32 %v1905, 1.0
  %v1978 = vadd.f32 %v1906, 1.0
  %v1979 = vadd.f32 %v1907, 1.0
  %v1980 = vadd.f32 %v1908, 1.0
  %v1981 = vadd.f32 %v1909, 1.0
  %v1982 = vadd.f32 %v1910, 1.0
  %v1983 = vadd.f32 %v1911, 1.0
  %v1984 = vadd.f32 %v1912, 1.0
  %v1985 = vadd.f32 %v1913, 1.0
  %v1986 = vadd.f32 %v1914, 1.0
  %v1987 = vadd.f32 %v1915, 1.0
  %v1988 = vadd.f32 %v1916, 1.0
  %v1989 = vadd.f32 %v1917, 1.0
  %v1990 = vadd.f32 %v1918, 1.0
  %v1991 = vmul.f32 %v1919, 0.5
  %v1992 = vmul.f32 %v1920, 0.5
  %v1993 = vmul.f32 %v1921, 0.5
  %v1994 = vmul.f32 %v1922, 0.5
  %v1995 = vmul.f32 %v1923, 0.5
  %v1996 = vmul.f32 %v1924, 0.5
  %v1997 = vmul.f32 %v1925, 0.5
  %v1998 = vmul.f32 %v1926, 0.5
  %v1999 = vmul.f32 %v1927, 0.5
  %v2000 = vmul.f32 %v1928, 0.5
  %v2001 = vmul.f32 %v1929, 0.5
  %v2002 = vmul.f32 %v1930, 0.5
  %v2003 = vmul.f32 %v1931, 0.5
  %v2004 = vmul.f32 %v1932, 0.5
  %v2005 = vmul.f32 %v1933, 0.5
  %v2006 = vmul.f32 %v1934, 0.5
  %v2007 = vmul.f32 %v1935, 0.5
  %v2008 = vmul.f32 %v1936, 0.5
  %v2009 = vmul.f32 %v1937, 0.5
  %v2010 = vmul.f32 %v1938, 0.5
  %v2011 = vmul.f32 %v1939, 0.5
  %v2012 = vmul.f32 %v1940, 0.5
  %v2013 = vmul.f32 %v1941, 0.5
  %v2014 = vmul.f32 %v1942, 0.5
  %v2015 = vmul.f32 %v1943, 0.5
  %v2016 = vmul.f32 %v1944, 0.5
  %v2017 = vmul.f32 %v1945, 0.5
  %v2018 = vmul.f32 %v1946, 0.5
  %v2019 = vmul.f32 %v1947, 0.5
  %v2020 = vmul.f32 %v1948, 0.5
  %v2021 = vmul.f32 %v1949, 0.5
  %v2022 = vmul.f32 %v1950, 0.5
  %v2023 = vmul.f32 %v1951, 0.5
  %v2024 = vmul.f32 %v1952, 0.5
  %v2025 = vmul.f32 %v1953, 0.5
  %v2026 = vmul.f32 %v1954, 0.5
  %v2027 = vmul.f32 %v1955, 0.5
  %v2028 = vmul.f32 %v1956, 0.5
  %v2029 = vmul.f32 %v1957, 0.5
  %v2030 = vmul.f32 %v1958, 0.5
  %v2031 = vmul.f32 %v1959, 0.5
  %v2032 = vmul.f32 %v1960, 0.5
  %v2033 = vmul.f32 %v1961, 0.5
  %v2034 = vmul.f32 %v1962, 0.5
  %v2035 = vmul.f32 %v1963, 0.5
  %v2036 = vmul.f32 %v1964, 0.5
  %v2037 = vmul.f32 %v1965, 0.5
  %v2038 = vmul.f32 %v1966, 0.5
  %v2039 = vmul.f32 %v1967, 0.5
  %v2040 = vmul.f32 %v1968, 0.5
  %v2041 = vmul.f32 %v1969, 0.5
  %v2042 = vmul.f32 %v1970, 0.5
  %v2043 = vmul.f32 %v1971, 0.5
  %v2044 = vmul.f32 %v1972, 0.5
  %v2045 = vmul.f32 %v1973, 0.5
  %v2046 = vmul.f32 %v1974, 0.5
  %v2047 = vmul.f32 %v1975, 0.5
  %v2048 = vmul.f32 %v1976, 0.5
  %v2049 = vmul.f32 %v1977, 0.5
  %v2050 = vmul.f32 %v1978, 0.5
  %v2051 = vmul.f32 %v1979, 0.5
  %v2052 = vmul.f32 %v1980, 0.5
  %v2053 = vmul.f32 %v1981, 0.5
  %v2054 = vmul.f32 %v1982, 0.5
  %v2055 = vmul.f32 %v1983, 0.5
  %v2056 = vmul.f32 %v1984, 0.5
  %v2057 = vmul.f32 %v1985, 0.5
  %v2058 = vmul.f32 %v1986, 0.5
  %v2059 = vmul.f32 %v1987, 0.5
  %v2060 = vmul.f32 %v1988, 0.5
  %v2061 = vmul.f32 %v1989, 0.5
  %v2062 = vmul.f32 %v1990, 0.5
  %2063 = vst.msk [vmem:[%s4] sm:$0xff] %vm644, %v1991
  %2064 = vst.msk [vmem:[%s4 + $0x8] sm:$0xff] %vm644, %v1992
  %2065 = vst.msk [vmem:[%s4 + $0x10] sm:$0xff] %vm644, %v1993
  %2066 = vst.msk [vmem:[%s4 + $0x18] sm:$0xff] %vm644, %v1994
  %2067 = vst.msk [vmem:[%s4 + $0x20] sm:$0xff] %vm644, %v1995
  %2068 = vst.msk [vmem:[%s4 + $0x28] sm:$0xff] %vm644, %v1996
  %2069 = vst.msk [vmem:[%s4 + $0x30] sm:$0xff] %vm644, %v1997
  %2070 = vst.msk [vmem:[%s4 + $0x38] sm:$0xff] %vm644, %v1998
  %2071 = vst.msk [vmem:[%s4 + $0x40] sm:$0x3] %vm669, %v1999
  %2072 = vst.msk [vmem:[%s4 + $0x48] sm:$0xff] %vm644, %v2000
  %2073 = vst.msk [vmem:[%s4 + $0x50] sm:$0xff] %vm644, %v2001
  %2074 = vst.msk [vmem:[%s4 + $0x58] sm:$0xff] %vm644, %v2002
  %2075 = vst.msk [vmem:[%s4 + $0x60] sm:$0xff] %vm644, %v2003
  %2076 = vst.msk [vmem:[%s4 + $0x68] sm:$0xff] %vm644, %v2004
  %2077 = vst.msk [vmem:[%s4 + $0x70] sm:$0xff] %vm644, %v2005
  %2078 = vst.msk [vmem:[%s4 + $0x78] sm:$0xff] %vm644, %v2006
  %2079 = vst.msk [vmem:[%s4 + $0x80] sm:$0xff] %vm644, %v2007
  %2080 = vst.msk [vmem:[%s4 + $0x88] sm:$0x3] %vm669, %v2008
  %2081 = vst.msk [vmem:[%s4 + $0x90] sm:$0xff] %vm644, %v2009
  %2082 = vst.msk [vmem:[%s4 + $0x98] sm:$0xff] %vm644, %v2010
  %2083 = vst.msk [vmem:[%s4 + $0xa0] sm:$0xff] %vm644, %v2011
  %2084 = vst.msk [vmem:[%s4 + $0xa8] sm:$0xff] %vm644, %v2012
  %2085 = vst.msk [vmem:[%s4 + $0xb0] sm:$0xff] %vm644, %v2013
  %2086 = vst.msk [vmem:[%s4 + $0xb8] sm:$0xff] %vm644, %v2014
  %2087 = vst.msk [vmem:[%s4 + $0xc0] sm:$0xff] %vm644, %v2015
  %2088 = vst.msk [vmem:[%s4 + $0xc8] sm:$0xff] %vm644, %v2016
  %2089 = vst.msk [vmem:[%s4 + $0xd0] sm:$0x3] %vm669, %v2017
  %2090 = vst.msk [vmem:[%s4 + $0xd8] sm:$0xff] %vm644, %v2018
  %2091 = vst.msk [vmem:[%s4 + $0xe0] sm:$0xff] %vm644, %v2019
  %2092 = vst.msk [vmem:[%s4 + $0xe8] sm:$0xff] %vm644, %v2020
  %2093 = vst.msk [vmem:[%s4 + $0xf0] sm:$0xff] %vm644, %v2021
  %2094 = vst.msk [vmem:[%s4 + $0xf8] sm:$0xff] %vm644, %v2022
  %2095 = vst.msk [vmem:[%s4 + $0x100] sm:$0xff] %vm644, %v2023
  %2096 = vst.msk [vmem:[%s4 + $0x108] sm:$0xff] %vm644, %v2024
  %2097 = vst.msk [vmem:[%s4 + $0x110] sm:$0xff] %vm644, %v2025
  %2098 = vst.msk [vmem:[%s4 + $0x118] sm:$0x3] %vm669, %v2026
  %2099 = vst.msk [vmem:[%s4 + $0x120] sm:$0xff] %vm644, %v2027
  %2100 = vst.msk [vmem:[%s4 + $0x128] sm:$0xff] %vm644, %v2028
  %2101 = vst.msk [vmem:[%s4 + $0x130] sm:$0xff] %vm644, %v2029
  %2102 = vst.msk [vmem:[%s4 + $0x138] sm:$0xff] %vm644, %v2030
  %2103 = vst.msk [vmem:[%s4 + $0x140] sm:$0xff] %vm644, %v2031
  %2104 = vst.msk [vmem:[%s4 + $0x148] sm:$0xff] %vm644, %v2032
  %2105 = vst.msk [vmem:[%s4 + $0x150] sm:$0xff] %vm644, %v2033
  %2106 = vst.msk [vmem:[%s4 + $0x158] sm:$0xff] %vm644, %v2034
  %2107 = vst.msk [vmem:[%s4 + $0x160] sm:$0x3] %vm669, %v2035
  %2108 = vst.msk [vmem:[%s4 + $0x168] sm:$0xff] %vm644, %v2036
  %2109 = vst.msk [vmem:[%s4 + $0x170] sm:$0xff] %vm644, %v2037
  %2110 = vst.msk [vmem:[%s4 + $0x178] sm:$0xff] %vm644, %v2038
  %2111 = vst.msk [vmem:[%s4 + $0x180] sm:$0xff] %vm644, %v2039
  %2112 = vst.msk [vmem:[%s4 + $0x188] sm:$0xff] %vm644, %v2040
  %2113 = vst.msk [vmem:[%s4 + $0x190] sm:$0xff] %vm644, %v2041
  %2114 = vst.msk [vmem:[%s4 + $0x198] sm:$0xff] %vm644, %v2042
  %2115 = vst.msk [vmem:[%s4 + $0x1a0] sm:$0xff] %vm644, %v2043
  %2116 = vst.msk [vmem:[%s4 + $0x1a8] sm:$0x3] %vm669, %v2044
  %2117 = vst.msk [vmem:[%s4 + $0x1b0] sm:$0xff] %vm644, %v2045
  %2118 = vst.msk [vmem:[%s4 + $0x1b8] sm:$0xff] %vm644, %v2046
  %2119 = vst.msk [vmem:[%s4 + $0x1c0] sm:$0xff] %vm644, %v2047
  %2120 = vst.msk [vmem:[%s4 + $0x1c8] sm:$0xff] %vm644, %v2048
  %2121 = vst.msk [vmem:[%s4 + $0x1d0] sm:$0xff] %vm644, %v2049
  %2122 = vst.msk [vmem:[%s4 + $0x1d8] sm:$0xff] %vm644, %v2050
  %2123 = vst.msk [vmem:[%s4 + $0x1e0] sm:$0xff] %vm644, %v2051
  %2124 = vst.msk [vmem:[%s4 + $0x1e8] sm:$0xff] %vm644, %v2052
  %2125 = vst.msk [vmem:[%s4 + $0x1f0] sm:$0x3] %vm669, %v2053
  %2126 = vst.msk [vmem:[%s4 + $0x1f8] sm:$0xff] %vm644, %v2054
  %2127 = vst.msk [vmem:[%s4 + $0x200] sm:$0xff] %vm644, %v2055
  %2128 = vst.msk [vmem:[%s4 + $0x208] sm:$0xff] %vm644, %v2056
  %2129 = vst.msk [vmem:[%s4 + $0x210] sm:$0xff] %vm644, %v2057
  %2130 = vst.msk [vmem:[%s4 + $0x218] sm:$0xff] %vm644, %v2058
  %2131 = vst.msk [vmem:[%s4 + $0x220] sm:$0xff] %vm644, %v2059
  %2132 = vst.msk [vmem:[%s4 + $0x228] sm:$0xff] %vm644, %v2060
  %2133 = vst.msk [vmem:[%s4 + $0x230] sm:$0xff] %vm644, %v2061
  %2134 = vst.msk [vmem:[%s4 + $0x238] sm:$0x3] %vm669, %v2062
  // Predicated region
  $region18: #{model_forward.1} parent=0 // pred_check
    _
  $region19: #{model_forward.1} parent=0 // pred_check_branch
    %2136 = sbr.rel (0) target = $region21
  $region20: #{model_forward.1} parent=0 // pred_region
    _
  $region21: #{model_forward.1} parent=0 // pred_fallthru
    _
  // Predicated region
  $region22: #{model_forward.1} parent=0 // pred_check
    _
  $region23: #{model_forward.1} parent=0 // pred_check_branch
    %2138 = sbr.rel (0) target = $region25
  $region24: #{model_forward.1} parent=0 // pred_region
    _
  $region25: #{model_forward.1} parent=0 // pred_fallthru
    _

</llo_original>
